<compile_context>
chip_gen: v7x
topology: tpu7x:2x2x1
jax: 0.10.0
libtpu: 0.0.40
codegen_flags: <defaults>
</compile_context>

<pallas_src>
import functools

import jax
import jax.numpy as jnp
from jax.experimental import pallas as pl
from jax.experimental.pallas import tpu as pltpu

DATA_DIM = 1                       # 'action' column -> x[:, None]
COND_DIM = 2                       # ['position', 'velocity']
IN_COLS = DATA_DIM + 1 + COND_DIM  # packed columns: [x | t | c] = 4
N_UNIT = 256


# --------------------------------------------------------------------------------------
# Kernel
# --------------------------------------------------------------------------------------
def _mlp_kernel(inp_ref,
                w1_ref, b1_ref, w1b_ref, b1b_ref, w1c_ref, b1c_ref,
                w2_ref, b2_ref, w2b_ref, b2b_ref, w2c_ref, b2c_ref,
                w3_ref, b3_ref, w4r_ref, b4_ref,
                out_ref, *, compute_dtype):
    f32 = jnp.float32
    relu = lambda v: jnp.maximum(v, 0.0)

    inp = inp_ref[...].astype(f32)                 # [tb, 4] packed [x | t | c]
    xv = inp[:, 0:1]                               # noised action       [tb, 1]
    tv = inp[:, 1:2]                               # beta / timestep     [tb, 1]

    # ---- layer 1: degenerate GEMMs (K=1 / K=1 / K=COND_DIM) on the VPU as
    #      broadcast outer-products; the MXU is reserved for the 256x256 GEMMs. ----
    xx = relu(xv * w1_ref[...].astype(f32) + b1_ref[...])           # [tb, 256]
    bb = relu(tv * w1b_ref[...].astype(f32) + b1b_ref[...])         # [tb, 256]
    w1c = w1c_ref[...].astype(f32)                                   # [COND_DIM, 256]
    cc = b1c_ref[...] + inp[:, 2:3] * w1c[0:1, :]
    for k in range(1, COND_DIM):
        cc = cc + inp[:, 2 + k:3 + k] * w1c[k:k + 1, :]
    cc = relu(cc)

    # ---- layer 2 + merge: three 256x256 MXU GEMMs fused into one f32 accumulator ----
    def big(a, w_ref, b_ref):
        return relu(jnp.dot(a.astype(compute_dtype), w_ref[...],
                            preferred_element_type=jnp.float32) + b_ref[...])

    h = big(xx, w2_ref, b2_ref)
    h = h + big(bb, w2b_ref, b2b_ref)
    h = h + big(cc, w2c_ref, b2c_ref)

    # ---- layer 3: 256x256 MXU GEMM ----
    hh = big(h, w3_ref, b3_ref)

    # ---- layer 4 (N=1): VPU multiply + lane (XLU) reduction instead of an MXU pass ----
    out = jnp.sum(hh * w4r_ref[...], axis=-1, keepdims=True) + b4_ref[...]
    out_ref[...] = out.astype(out_ref.dtype)


# --------------------------------------------------------------------------------------
# Tiling / VMEM sizing
# --------------------------------------------------------------------------------------
def _round_up(n, m):
    return ((n + m - 1) // m) * m


def _tpu_vmem_bytes():
    try:
        return int(pltpu.get_tpu_info().vmem_capacity_bytes)
    except Exception:
        return 64 * 1024 * 1024  # conservative (v7x-sized) fallback


def _pick_tiling(batch, batch_tile=None):
    """Returns (batch_tile, vmem_limit_bytes) sized per TPU generation."""
    vmem = _tpu_vmem_bytes()
    if vmem >= 96 * 1024 * 1024:           # v5e / v6e: 128 MiB physical VMEM
        max_tile, vmem_limit = 4096, 80 * 1024 * 1024
    else:                                  # v7x: 64 MiB physical VMEM
        max_tile, vmem_limit = 2048, 40 * 1024 * 1024
    if batch_tile is not None:
        assert batch_tile % 8 == 0, "batch_tile must be a multiple of 8 sublanes"
        return batch_tile, vmem_limit
    # Keep the grid at >= 2 steps whenever possible so the "parallel" batch axis can
    # be sharded across v7x's two TensorCores (harmless extra ~0.35us elsewhere).
    tb = min(max_tile, max(8, _round_up(pl.cdiv(batch, 2), 8)))
    return tb, vmem_limit


# --------------------------------------------------------------------------------------
# Wrapper
# --------------------------------------------------------------------------------------
def _prepare_weights(params, compute_dtype):
    """Cast the four big-GEMM weights once; everything else stays f32 (VPU path)."""
    cd = compute_dtype
    return [
        params["w1"], params["b1"],
        params["w1_beta"], params["b1_beta"],
        params["w1_cond"], params["b1_cond"],
        params["w2"].astype(cd), params["b2"],
        params["w2_beta"].astype(cd), params["b2_beta"],
        params["w2_cond"].astype(cd), params["b2_cond"],
        params["w3"].astype(cd), params["b3"],
        params["w4"].reshape(1, N_UNIT),      # [256,1] -> [1,256] row for lane-wise mul
        params["b4"],
    ]


def make_forward(params, *, compute_dtype=jnp.bfloat16, batch_tile=None, jit=True):
    """Build a forward fn closing over pre-cast weights (cast happens once, not per call)."""
    weights = _prepare_weights(params, compute_dtype)
    kernel = functools.partial(_mlp_kernel, compute_dtype=compute_dtype)

    weight_bytes = sum(int(w.size) * w.dtype.itemsize for w in weights)

    def forward(x, c, t):
        B = x.shape[0]
        tb, vmem_limit = _pick_tiling(B, batch_tile)

        # Pack [x | t | c] into a single lane-narrow stream (one DMA per grid step).
        packed = jnp.concatenate(
            [x.astype(jnp.float32), t.astype(jnp.float32), c.astype(jnp.float32)],
            axis=1)
        grid = pl.cdiv(B, tb)
        padded_b = grid * tb
        if padded_b != B:   # zero-pad so arbitrary B keeps the large-tile path
            packed = jnp.pad(packed, ((0, padded_b - B), (0, 0)))

        # Weights / biases: single full-extent blocks, resident across all grid steps.
        def weight_spec(arr):
            return pl.BlockSpec(arr.shape, lambda i: (0, 0))

        in_specs = [pl.BlockSpec((tb, IN_COLS), lambda i: (i, 0))] + \
                   [weight_spec(w) for w in weights]

        io_bytes = (int(packed.size) + padded_b * DATA_DIM) * 4
        flops = 2 * padded_b * 4 * N_UNIT * N_UNIT   # four 256x256 GEMMs dominate

        out = pl.pallas_call(
            kernel,
            out_shape=jax.ShapeDtypeStruct((padded_b, DATA_DIM), x.dtype),
            grid_spec=pltpu.PrefetchScalarGridSpec(
                num_scalar_prefetch=0,
                grid=(grid,),
                in_specs=in_specs,
                out_specs=pl.BlockSpec((tb, DATA_DIM), lambda i: (i, 0)),
            ),
            compiler_params=pltpu.CompilerParams(
                dimension_semantics=("parallel",),   # megacore-shard batch tiles (v7x)
                vmem_limit_bytes=vmem_limit,
            ),
            cost_estimate=pl.CostEstimate(
                flops=flops, transcendentals=0,
                bytes_accessed=weight_bytes + io_bytes),
        )(packed, *weights)
        return out[:B]

    return jax.jit(forward) if jit else forward


def conditional_diffusion_net(x, c, t, params, *, compute_dtype=jnp.bfloat16,
                              batch_tile=None):
    """One-shot convenience wrapper: x [B,1], c [B,2], t [B,1] -> [B,1]."""
    return make_forward(params, compute_dtype=compute_dtype,
                        batch_tile=batch_tile, jit=False)(x, c, t)


# --------------------------------------------------------------------------------------
# Params + reference
# --------------------------------------------------------------------------------------
def init_params(key):
    """Deterministic init mirroring nn.Linear shapes; weights stored as [in, out]."""
    def linear_init(key, fan_in, fan_out):
        kw, kb = jax.random.split(key)
        bound = 1.0 / jnp.sqrt(fan_in)
        w = jax.random.uniform(kw, (fan_in, fan_out), jnp.float32, -bound, bound)
        b = jax.random.uniform(kb, (1, fan_out), jnp.float32, -bound, bound)
        return w, b

    keys = jax.random.split(key, 8)
    p = {}
    p["w1"], p["b1"] = linear_init(keys[0], DATA_DIM, N_UNIT)
    p["w2"], p["b2"] = linear_init(keys[1], N_UNIT, N_UNIT)
    p["w1_beta"], p["b1_beta"] = linear_init(keys[2], 1, N_UNIT)
    p["w2_beta"], p["b2_beta"] = linear_init(keys[3], N_UNIT, N_UNIT)
    p["w1_cond"], p["b1_cond"] = linear_init(keys[4], COND_DIM, N_UNIT)
    p["w2_cond"], p["b2_cond"] = linear_init(keys[5], N_UNIT, N_UNIT)
    p["w3"], p["b3"] = linear_init(keys[6], N_UNIT, N_UNIT)
    p["w4"], p["b4"] = linear_init(keys[7], N_UNIT, DATA_DIM)
    return p


def reference_forward(x, c, t, p):
    """Pure-JAX reference, same math as the PyTorch module (f32, highest precision)."""
    relu = lambda v: jnp.maximum(v, 0.0)
    hp = jax.lax.Precision.HIGHEST
    dot = lambda a, b: jnp.dot(a, b, precision=hp)
    xx = relu(dot(x, p["w1"]) + p["b1"])
    xx = relu(dot(xx, p["w2"]) + p["b2"])
    bb = relu(dot(t, p["w1_beta"]) + p["b1_beta"])
    bb = relu(dot(bb, p["w2_beta"]) + p["b2_beta"])
    cc = relu(dot(c, p["w1_cond"]) + p["b1_cond"])
    cc = relu(dot(cc, p["w2_cond"]) + p["b2_cond"])
    hh = relu(dot(xx + bb + cc, p["w3"]) + p["b3"])
    return dot(hh, p["w4"]) + p["b4"]


# --------------------------------------------------------------------------------------
# Demo / self-test (small shapes)
# --------------------------------------------------------------------------------------
if __name__ == "__main__":
    key = jax.random.PRNGKey(0)
    kp, kx, kc, kt = jax.random.split(key, 4)

    B = 64
    params = init_params(kp)
    x = jax.random.normal(kx, (B, DATA_DIM), jnp.float32)   # noised 'action'
    c = jax.random.normal(kc, (B, COND_DIM), jnp.float32)   # ['position', 'velocity']
    t = jax.random.uniform(kt, (B, 1), jnp.float32)         # beta / timestep scalar

    ref = reference_forward(x, c, t, params)

    # f32 compute path: tight check against the pure-JAX reference.
    fwd_f32 = make_forward(params, compute_dtype=jnp.float32)
    out_f32 = jax.block_until_ready(fwd_f32(x, c, t))
    assert out_f32.shape == (B, DATA_DIM)
    assert jnp.allclose(out_f32, ref, atol=1e-3, rtol=1e-3)

    # Default bf16 fast path (native MXU rate on v6e/v7x): bf16-appropriate tolerance.
    fwd_bf16 = make_forward(params)                          # compute_dtype defaults to bf16
    out_bf16 = jax.block_until_ready(fwd_bf16(x, c, t))
    rel_err = jnp.max(jnp.abs(out_bf16 - ref)) / (jnp.max(jnp.abs(ref)) + 1e-6)
    assert bool(rel_err < 0.1)

    # Non-divisible batch exercises the pad + slice path (no small-tile fallback).
    B2 = 50
    out_odd = jax.block_until_ready(fwd_bf16(x[:B2], c[:B2], t[:B2]))
    assert out_odd.shape == (B2, DATA_DIM)

    print("KERNEL_OK")
</pallas_src>

<mosaic_0001>
module attributes {stable_mosaic.version = 11 : i64} {
  func.func @_mlp_kernel(%arg0: i32, %arg1: memref<32x4xf32, #tpu.memory_space<vmem>>, %arg2: memref<1x256xf32, #tpu.memory_space<vmem>>, %arg3: memref<1x256xf32, #tpu.memory_space<vmem>>, %arg4: memref<1x256xf32, #tpu.memory_space<vmem>>, %arg5: memref<1x256xf32, #tpu.memory_space<vmem>>, %arg6: memref<2x256xf32, #tpu.memory_space<vmem>>, %arg7: memref<1x256xf32, #tpu.memory_space<vmem>>, %arg8: memref<256x256xf32, #tpu.memory_space<vmem>>, %arg9: memref<1x256xf32, #tpu.memory_space<vmem>>, %arg10: memref<256x256xf32, #tpu.memory_space<vmem>>, %arg11: memref<1x256xf32, #tpu.memory_space<vmem>>, %arg12: memref<256x256xf32, #tpu.memory_space<vmem>>, %arg13: memref<1x256xf32, #tpu.memory_space<vmem>>, %arg14: memref<256x256xf32, #tpu.memory_space<vmem>>, %arg15: memref<1x256xf32, #tpu.memory_space<vmem>>, %arg16: memref<1x256xf32, #tpu.memory_space<vmem>>, %arg17: memref<1x1xf32, #tpu.memory_space<vmem>>, %arg18: memref<32x1xf32, #tpu.memory_space<vmem>>) attributes {dimension_semantics = [#tpu.dimension_semantics<parallel>], iteration_bounds = array<i64: 2>, scalar_prefetch = 0 : i64, scratch_operands = 0 : i64, tpu.core_type = #tpu.core_type<tc>, window_params = [{transform_indices = @transform_0, window_bounds = array<i64: 32, 4>}, {pipeline_mode = #tpu.pipeline_mode<synchronous>, transform_indices = @transform_1, window_bounds = array<i64: 1, 256>}, {pipeline_mode = #tpu.pipeline_mode<synchronous>, transform_indices = @transform_2, window_bounds = array<i64: 1, 256>}, {pipeline_mode = #tpu.pipeline_mode<synchronous>, transform_indices = @transform_3, window_bounds = array<i64: 1, 256>}, {pipeline_mode = #tpu.pipeline_mode<synchronous>, transform_indices = @transform_4, window_bounds = array<i64: 1, 256>}, {pipeline_mode = #tpu.pipeline_mode<synchronous>, transform_indices = @transform_5, window_bounds = array<i64: 2, 256>}, {pipeline_mode = #tpu.pipeline_mode<synchronous>, transform_indices = @transform_6, window_bounds = array<i64: 1, 256>}, {pipeline_mode = #tpu.pipeline_mode<synchronous>, transform_indices = @transform_7, window_bounds = array<i64: 256, 256>}, {pipeline_mode = #tpu.pipeline_mode<synchronous>, transform_indices = @transform_8, window_bounds = array<i64: 1, 256>}, {pipeline_mode = #tpu.pipeline_mode<synchronous>, transform_indices = @transform_9, window_bounds = array<i64: 256, 256>}, {pipeline_mode = #tpu.pipeline_mode<synchronous>, transform_indices = @transform_10, window_bounds = array<i64: 1, 256>}, {pipeline_mode = #tpu.pipeline_mode<synchronous>, transform_indices = @transform_11, window_bounds = array<i64: 256, 256>}, {pipeline_mode = #tpu.pipeline_mode<synchronous>, transform_indices = @transform_12, window_bounds = array<i64: 1, 256>}, {pipeline_mode = #tpu.pipeline_mode<synchronous>, transform_indices = @transform_13, window_bounds = array<i64: 256, 256>}, {pipeline_mode = #tpu.pipeline_mode<synchronous>, transform_indices = @transform_14, window_bounds = array<i64: 1, 256>}, {pipeline_mode = #tpu.pipeline_mode<synchronous>, transform_indices = @transform_15, window_bounds = array<i64: 1, 256>}, {pipeline_mode = #tpu.pipeline_mode<synchronous>, transform_indices = @transform_16, window_bounds = array<i64: 1, 1>}, {transform_indices = @transform_17, window_bounds = array<i64: 32, 1>}]} {
    %c0 = arith.constant 0 : index
    %c0_0 = arith.constant 0 : index
    %0 = vector.load %arg1[%c0, %c0_0] : memref<32x4xf32, #tpu.memory_space<vmem>>, vector<32x4xf32>
    %1 = vector.extract_strided_slice %0 {offsets = [0, 0], sizes = [32, 1], strides = [1, 1]} : vector<32x4xf32> to vector<32x1xf32>
    %2 = vector.extract_strided_slice %0 {offsets = [0, 1], sizes = [32, 1], strides = [1, 1]} : vector<32x4xf32> to vector<32x1xf32>
    %c0_1 = arith.constant 0 : index
    %c0_2 = arith.constant 0 : index
    %3 = vector.load %arg2[%c0_1, %c0_2] : memref<1x256xf32, #tpu.memory_space<vmem>>, vector<1x256xf32>
    %4 = vector.broadcast %1 : vector<32x1xf32> to vector<32x256xf32>
    %5 = vector.broadcast %3 : vector<1x256xf32> to vector<32x256xf32>
    %6 = arith.mulf %4, %5 : vector<32x256xf32>
    %c0_3 = arith.constant 0 : index
    %c0_4 = arith.constant 0 : index
    %7 = vector.load %arg3[%c0_3, %c0_4] : memref<1x256xf32, #tpu.memory_space<vmem>>, vector<1x256xf32>
    %8 = vector.broadcast %7 : vector<1x256xf32> to vector<32x256xf32>
    %9 = arith.addf %6, %8 : vector<32x256xf32>
    %cst = arith.constant 0.000000e+00 : f32
    %10 = vector.broadcast %cst : f32 to vector<32x256xf32>
    %11 = arith.maximumf %9, %10 : vector<32x256xf32>
    %c0_5 = arith.constant 0 : index
    %c0_6 = arith.constant 0 : index
    %12 = vector.load %arg4[%c0_5, %c0_6] : memref<1x256xf32, #tpu.memory_space<vmem>>, vector<1x256xf32>
    %13 = vector.broadcast %2 : vector<32x1xf32> to vector<32x256xf32>
    %14 = vector.broadcast %12 : vector<1x256xf32> to vector<32x256xf32>
    %15 = arith.mulf %13, %14 : vector<32x256xf32>
    %c0_7 = arith.constant 0 : index
    %c0_8 = arith.constant 0 : index
    %16 = vector.load %arg5[%c0_7, %c0_8] : memref<1x256xf32, #tpu.memory_space<vmem>>, vector<1x256xf32>
    %17 = vector.broadcast %16 : vector<1x256xf32> to vector<32x256xf32>
    %18 = arith.addf %15, %17 : vector<32x256xf32>
    %cst_9 = arith.constant 0.000000e+00 : f32
    %19 = vector.broadcast %cst_9 : f32 to vector<32x256xf32>
    %20 = arith.maximumf %18, %19 : vector<32x256xf32>
    %c0_10 = arith.constant 0 : index
    %c0_11 = arith.constant 0 : index
    %21 = vector.load %arg6[%c0_10, %c0_11] : memref<2x256xf32, #tpu.memory_space<vmem>>, vector<2x256xf32>
    %c0_12 = arith.constant 0 : index
    %c0_13 = arith.constant 0 : index
    %22 = vector.load %arg7[%c0_12, %c0_13] : memref<1x256xf32, #tpu.memory_space<vmem>>, vector<1x256xf32>
    %23 = vector.extract_strided_slice %0 {offsets = [0, 2], sizes = [32, 1], strides = [1, 1]} : vector<32x4xf32> to vector<32x1xf32>
    %24 = vector.extract_strided_slice %21 {offsets = [0, 0], sizes = [1, 256], strides = [1, 1]} : vector<2x256xf32> to vector<1x256xf32>
    %25 = vector.broadcast %23 : vector<32x1xf32> to vector<32x256xf32>
    %26 = vector.broadcast %24 : vector<1x256xf32> to vector<32x256xf32>
    %27 = arith.mulf %25, %26 : vector<32x256xf32>
    %28 = vector.broadcast %22 : vector<1x256xf32> to vector<32x256xf32>
    %29 = arith.addf %28, %27 : vector<32x256xf32>
    %30 = vector.extract_strided_slice %0 {offsets = [0, 3], sizes = [32, 1], strides = [1, 1]} : vector<32x4xf32> to vector<32x1xf32>
    %31 = vector.extract_strided_slice %21 {offsets = [1, 0], sizes = [1, 256], strides = [1, 1]} : vector<2x256xf32> to vector<1x256xf32>
    %32 = vector.broadcast %30 : vector<32x1xf32> to vector<32x256xf32>
    %33 = vector.broadcast %31 : vector<1x256xf32> to vector<32x256xf32>
    %34 = arith.mulf %32, %33 : vector<32x256xf32>
    %35 = arith.addf %29, %34 : vector<32x256xf32>
    %cst_14 = arith.constant 0.000000e+00 : f32
    %36 = vector.broadcast %cst_14 : f32 to vector<32x256xf32>
    %37 = arith.maximumf %35, %36 : vector<32x256xf32>
    %c0_15 = arith.constant 0 : index
    %c0_16 = arith.constant 0 : index
    %38 = vector.load %arg8[%c0_15, %c0_16] : memref<256x256xf32, #tpu.memory_space<vmem>>, vector<256x256xf32>
    %cst_17 = arith.constant dense<0.000000e+00> : vector<32x256xf32>
    %39 = tpu.matmul %11, %38, %cst_17 {dimension_numbers = #tpu.dot_dimension_numbers<[1], [0], [0], [1], [0, 0, 1, 1], [], []>} : vector<32x256xf32>, vector<256x256xf32>, vector<32x256xf32> -> vector<32x256xf32>
    %c0_18 = arith.constant 0 : index
    %c0_19 = arith.constant 0 : index
    %40 = vector.load %arg9[%c0_18, %c0_19] : memref<1x256xf32, #tpu.memory_space<vmem>>, vector<1x256xf32>
    %41 = vector.broadcast %40 : vector<1x256xf32> to vector<32x256xf32>
    %42 = arith.addf %39, %41 : vector<32x256xf32>
    %cst_20 = arith.constant 0.000000e+00 : f32
    %43 = vector.broadcast %cst_20 : f32 to vector<32x256xf32>
    %44 = arith.maximumf %42, %43 : vector<32x256xf32>
    %c0_21 = arith.constant 0 : index
    %c0_22 = arith.constant 0 : index
    %45 = vector.load %arg10[%c0_21, %c0_22] : memref<256x256xf32, #tpu.memory_space<vmem>>, vector<256x256xf32>
    %cst_23 = arith.constant dense<0.000000e+00> : vector<32x256xf32>
    %46 = tpu.matmul %20, %45, %cst_23 {dimension_numbers = #tpu.dot_dimension_numbers<[1], [0], [0], [1], [0, 0, 1, 1], [], []>} : vector<32x256xf32>, vector<256x256xf32>, vector<32x256xf32> -> vector<32x256xf32>
    %c0_24 = arith.constant 0 : index
    %c0_25 = arith.constant 0 : index
    %47 = vector.load %arg11[%c0_24, %c0_25] : memref<1x256xf32, #tpu.memory_space<vmem>>, vector<1x256xf32>
    %48 = vector.broadcast %47 : vector<1x256xf32> to vector<32x256xf32>
    %49 = arith.addf %46, %48 : vector<32x256xf32>
    %cst_26 = arith.constant 0.000000e+00 : f32
    %50 = vector.broadcast %cst_26 : f32 to vector<32x256xf32>
    %51 = arith.maximumf %49, %50 : vector<32x256xf32>
    %52 = arith.addf %44, %51 : vector<32x256xf32>
    %c0_27 = arith.constant 0 : index
    %c0_28 = arith.constant 0 : index
    %53 = vector.load %arg12[%c0_27, %c0_28] : memref<256x256xf32, #tpu.memory_space<vmem>>, vector<256x256xf32>
    %cst_29 = arith.constant dense<0.000000e+00> : vector<32x256xf32>
    %54 = tpu.matmul %37, %53, %cst_29 {dimension_numbers = #tpu.dot_dimension_numbers<[1], [0], [0], [1], [0, 0, 1, 1], [], []>} : vector<32x256xf32>, vector<256x256xf32>, vector<32x256xf32> -> vector<32x256xf32>
    %c0_30 = arith.constant 0 : index
    %c0_31 = arith.constant 0 : index
    %55 = vector.load %arg13[%c0_30, %c0_31] : memref<1x256xf32, #tpu.memory_space<vmem>>, vector<1x256xf32>
    %56 = vector.broadcast %55 : vector<1x256xf32> to vector<32x256xf32>
    %57 = arith.addf %54, %56 : vector<32x256xf32>
    %cst_32 = arith.constant 0.000000e+00 : f32
    %58 = vector.broadcast %cst_32 : f32 to vector<32x256xf32>
    %59 = arith.maximumf %57, %58 : vector<32x256xf32>
    %60 = arith.addf %52, %59 : vector<32x256xf32>
    %c0_33 = arith.constant 0 : index
    %c0_34 = arith.constant 0 : index
    %61 = vector.load %arg14[%c0_33, %c0_34] : memref<256x256xf32, #tpu.memory_space<vmem>>, vector<256x256xf32>
    %cst_35 = arith.constant dense<0.000000e+00> : vector<32x256xf32>
    %62 = tpu.matmul %60, %61, %cst_35 {dimension_numbers = #tpu.dot_dimension_numbers<[1], [0], [0], [1], [0, 0, 1, 1], [], []>} : vector<32x256xf32>, vector<256x256xf32>, vector<32x256xf32> -> vector<32x256xf32>
    %c0_36 = arith.constant 0 : index
    %c0_37 = arith.constant 0 : index
    %63 = vector.load %arg15[%c0_36, %c0_37] : memref<1x256xf32, #tpu.memory_space<vmem>>, vector<1x256xf32>
    %64 = vector.broadcast %63 : vector<1x256xf32> to vector<32x256xf32>
    %65 = arith.addf %62, %64 : vector<32x256xf32>
    %cst_38 = arith.constant 0.000000e+00 : f32
    %66 = vector.broadcast %cst_38 : f32 to vector<32x256xf32>
    %67 = arith.maximumf %65, %66 : vector<32x256xf32>
    %c0_39 = arith.constant 0 : index
    %c0_40 = arith.constant 0 : index
    %68 = vector.load %arg16[%c0_39, %c0_40] : memref<1x256xf32, #tpu.memory_space<vmem>>, vector<1x256xf32>
    %69 = vector.broadcast %68 : vector<1x256xf32> to vector<32x256xf32>
    %70 = arith.mulf %67, %69 : vector<32x256xf32>
    %cst_41 = arith.constant dense<0.000000e+00> : vector<32xf32>
    %71 = vector.multi_reduction <add>, %70, %cst_41 [1] : vector<32x256xf32> to vector<32xf32>
    %72 = vector.shape_cast %71 : vector<32xf32> to vector<32x1xf32>
    %c0_42 = arith.constant 0 : index
    %c0_43 = arith.constant 0 : index
    %73 = vector.load %arg17[%c0_42, %c0_43] : memref<1x1xf32, #tpu.memory_space<vmem>>, vector<1x1xf32>
    %74 = vector.broadcast %73 : vector<1x1xf32> to vector<32x1xf32>
    %75 = arith.addf %72, %74 : vector<32x1xf32>
    %c0_44 = arith.constant 0 : index
    %c0_45 = arith.constant 0 : index
    %76 = vector.load %arg18[%c0_44, %c0_45] : memref<32x1xf32, #tpu.memory_space<vmem>>, vector<32x1xf32>
    tpu.vector_store %arg18[%c0_44, %c0_45], %75 {strides = array<i32>} : memref<32x1xf32, #tpu.memory_space<vmem>>, vector<32x1xf32>,
    return
  }
  func.func @transform_0(%arg0: i32) -> (i32, i32) {
    %c0_i32 = arith.constant 0 : i32
    %c0_i32_0 = arith.constant 0 : i32
    return %arg0, %c0_i32 : i32, i32
  }
  func.func @transform_1(%arg0: i32) -> (i32, i32) {
    %c0_i32 = arith.constant 0 : i32
    %c0_i32_0 = arith.constant 0 : i32
    %c0_i32_1 = arith.constant 0 : i32
    return %c0_i32, %c0_i32_0 : i32, i32
  }
  func.func @transform_2(%arg0: i32) -> (i32, i32) {
    %c0_i32 = arith.constant 0 : i32
    %c0_i32_0 = arith.constant 0 : i32
    %c0_i32_1 = arith.constant 0 : i32
    return %c0_i32, %c0_i32_0 : i32, i32
  }
  func.func @transform_3(%arg0: i32) -> (i32, i32) {
    %c0_i32 = arith.constant 0 : i32
    %c0_i32_0 = arith.constant 0 : i32
    %c0_i32_1 = arith.constant 0 : i32
    return %c0_i32, %c0_i32_0 : i32, i32
  }
  func.func @transform_4(%arg0: i32) -> (i32, i32) {
    %c0_i32 = arith.constant 0 : i32
    %c0_i32_0 = arith.constant 0 : i32
    %c0_i32_1 = arith.constant 0 : i32
    return %c0_i32, %c0_i32_0 : i32, i32
  }
  func.func @transform_5(%arg0: i32) -> (i32, i32) {
    %c0_i32 = arith.constant 0 : i32
    %c0_i32_0 = arith.constant 0 : i32
    %c0_i32_1 = arith.constant 0 : i32
    return %c0_i32, %c0_i32_0 : i32, i32
  }
  func.func @transform_6(%arg0: i32) -> (i32, i32) {
    %c0_i32 = arith.constant 0 : i32
    %c0_i32_0 = arith.constant 0 : i32
    %c0_i32_1 = arith.constant 0 : i32
    return %c0_i32, %c0_i32_0 : i32, i32
  }
  func.func @transform_7(%arg0: i32) -> (i32, i32) {
    %c0_i32 = arith.constant 0 : i32
    %c0_i32_0 = arith.constant 0 : i32
    %c0_i32_1 = arith.constant 0 : i32
    return %c0_i32, %c0_i32_0 : i32, i32
  }
  func.func @transform_8(%arg0: i32) -> (i32, i32) {
    %c0_i32 = arith.constant 0 : i32
    %c0_i32_0 = arith.constant 0 : i32
    %c0_i32_1 = arith.constant 0 : i32
    return %c0_i32, %c0_i32_0 : i32, i32
  }
  func.func @transform_9(%arg0: i32) -> (i32, i32) {
    %c0_i32 = arith.constant 0 : i32
    %c0_i32_0 = arith.constant 0 : i32
    %c0_i32_1 = arith.constant 0 : i32
    return %c0_i32, %c0_i32_0 : i32, i32
  }
  func.func @transform_10(%arg0: i32) -> (i32, i32) {
    %c0_i32 = arith.constant 0 : i32
    %c0_i32_0 = arith.constant 0 : i32
    %c0_i32_1 = arith.constant 0 : i32
    return %c0_i32, %c0_i32_0 : i32, i32
  }
  func.func @transform_11(%arg0: i32) -> (i32, i32) {
    %c0_i32 = arith.constant 0 : i32
    %c0_i32_0 = arith.constant 0 : i32
    %c0_i32_1 = arith.constant 0 : i32
    return %c0_i32, %c0_i32_0 : i32, i32
  }
  func.func @transform_12(%arg0: i32) -> (i32, i32) {
    %c0_i32 = arith.constant 0 : i32
    %c0_i32_0 = arith.constant 0 : i32
    %c0_i32_1 = arith.constant 0 : i32
    return %c0_i32, %c0_i32_0 : i32, i32
  }
  func.func @transform_13(%arg0: i32) -> (i32, i32) {
    %c0_i32 = arith.constant 0 : i32
    %c0_i32_0 = arith.constant 0 : i32
    %c0_i32_1 = arith.constant 0 : i32
    return %c0_i32, %c0_i32_0 : i32, i32
  }
  func.func @transform_14(%arg0: i32) -> (i32, i32) {
    %c0_i32 = arith.constant 0 : i32
    %c0_i32_0 = arith.constant 0 : i32
    %c0_i32_1 = arith.constant 0 : i32
    return %c0_i32, %c0_i32_0 : i32, i32
  }
  func.func @transform_15(%arg0: i32) -> (i32, i32) {
    %c0_i32 = arith.constant 0 : i32
    %c0_i32_0 = arith.constant 0 : i32
    %c0_i32_1 = arith.constant 0 : i32
    return %c0_i32, %c0_i32_0 : i32, i32
  }
  func.func @transform_16(%arg0: i32) -> (i32, i32) {
    %c0_i32 = arith.constant 0 : i32
    %c0_i32_0 = arith.constant 0 : i32
    %c0_i32_1 = arith.constant 0 : i32
    return %c0_i32, %c0_i32_0 : i32, i32
  }
  func.func @transform_17(%arg0: i32) -> (i32, i32) {
    %c0_i32 = arith.constant 0 : i32
    %c0_i32_0 = arith.constant 0 : i32
    return %arg0, %c0_i32 : i32, i32
  }
}

</mosaic_0001>

<llo_original>
// kernel: forward.1
$region0: #{forward.1}
  #allocation0 [shape = 'u32[]', space=smem, size = 0x4, offset = 0x4, fixed_abs, tag = 'smem constant byte address 0x4 - core index']
  #allocation1 [shape = 'u32[144,128]{1,0:T(1,128)}', space=vmem, size = 0x12000, scoped, tag = 'internal scratch']
  #allocation2 [shape = 'f32[1,1]{1,0:T(1,128)S(1)}', space=vmem, size = 0x200, scoped, tag = 'scoped memory for forward.1']
  %s0 = inlined_call_operand.vmem [shape: f32[64,4], index: 0, kind: input, shape index: {}]
  %s1 = inlined_call_operand.vmem [shape: f32[1,256], index: 1, kind: input, shape index: {}]
  %s2 = inlined_call_operand.vmem [shape: f32[1,256], index: 2, kind: input, shape index: {}]
  %s3 = inlined_call_operand.vmem [shape: f32[1,256], index: 3, kind: input, shape index: {}]
  %s4 = inlined_call_operand.vmem [shape: f32[1,256], index: 4, kind: input, shape index: {}]
  %s5 = inlined_call_operand.vmem [shape: f32[2,256], index: 5, kind: input, shape index: {}]
  %s6 = inlined_call_operand.vmem [shape: f32[1,256], index: 6, kind: input, shape index: {}]
  %s7 = inlined_call_operand.hbm [shape: f32[256,256], index: 7, kind: input, shape index: {}]
  %s8 = inlined_call_operand.vmem [shape: f32[1,256], index: 8, kind: input, shape index: {}]
  %s9 = inlined_call_operand.hbm [shape: f32[256,256], index: 9, kind: input, shape index: {}]
  %s10 = inlined_call_operand.vmem [shape: f32[1,256], index: 10, kind: input, shape index: {}]
  %s11 = inlined_call_operand.hbm [shape: f32[256,256], index: 11, kind: input, shape index: {}]
  %s12 = inlined_call_operand.vmem [shape: f32[1,256], index: 12, kind: input, shape index: {}]
  %s13 = inlined_call_operand.hbm [shape: f32[256,256], index: 13, kind: input, shape index: {}]
  %s14 = inlined_call_operand.vmem [shape: f32[1,256], index: 14, kind: input, shape index: {}]
  %s15 = inlined_call_operand.vmem [shape: f32[1,256], index: 15, kind: input, shape index: {}]
  %s16 = inlined_call_operand.<no memory space> [shape: f32[1,1], index: 16, kind: input, shape index: {}]
  %s17 = inlined_call_operand.vmem [shape: f32[64,1], index: 17, kind: output, shape index: {}]
  %s18 = sld [smem:[#allocation0]]
  $region117: #{forward.1} parent=0
    _
  %s20 = ssub.s32 1, %s18
  %s21 = scalar_select 0, %s20, %s18
  %v22 = vstv %s16
  %23 = vst [vmem:[#allocation2] sm:$0x1] %v22
  $region1: #{forward.1} parent=0
    #allocation3 [shape = 'u8[262144]{0}', space=vmem, size = 0x40000, scoped, tag = 'input window, operand 7, single buffered']
    #allocation4 [shape = 's32[2]{0}', space=sflag, size = 0x8, scoped, tag = 'scoped memory for forward.1']
    #allocation5 [shape = 'u8[262144]{0}', space=vmem, size = 0x40000, scoped, tag = 'input window, operand 9, single buffered']
    #allocation6 [shape = 's32[1]{0}', space=sflag, size = 0x4, scoped, tag = 'scoped memory for forward.1']
    #allocation7 [shape = 'u8[262144]{0}', space=vmem, size = 0x40000, scoped, tag = 'input window, operand 11, single buffered']
    #allocation8 [shape = 'u8[262144]{0}', space=vmem, size = 0x40000, scoped, tag = 'input window, operand 13, single buffered']
    #allocation9 [shape = 's32[1]{0}', space=sflag, size = 0x4, scoped, tag = 'scoped memory for forward.1']
    %24 = vsyncpa [#allocation4], 0
    %25 = vsyncpa [#allocation6], 0
    %26 = vsyncpa [#allocation9], 0
    loop: start=0, step=1, limit=4
    $region2: #{forward.1} parent=1 // loop_pre_header
      _
    $region3: #{forward.1} parent=1 // loop_header
      %s28 = sphi 0, %s32
      %p29 = scmp.ge.s32.totalorder %s28, 4
      %s38 = sphi 0, %s40
      %s41 = sphi 0, %s38
      %s42 = sphi 0, %s41
      %s58 = sphi 0, %s42
      %s62 = sphi 0, %s62
      %s64 = sphi 0, %s62
      %s65 = sphi 0, %s64
      %s79 = sphi 0, %s65
      %s83 = sphi 0, %s83
      %s85 = sphi 0, %s83
      %s86 = sphi 0, %s85
      %s100 = sphi 0, %s86
      %s104 = sphi 0, %s104
      %s106 = sphi 0, %s104
      %s107 = sphi 0, %s106
      %s121 = sphi 0, %s107
      %s125 = sphi 0, %s125
      %s127 = sphi 0, %s125
      %s128 = sphi 0, %s127
      %s142 = sphi 0, %s128
      %s146 = sphi 0, %s146
      %s148 = sphi 0, %s146
      %s149 = sphi 0, %s148
      %s163 = sphi 0, %s149
      %s167 = sphi 0, %s167
      %s169 = sphi 0, %s167
      %s170 = sphi 0, %s169
      %s184 = sphi 0, %s170
      %s188 = sphi 0, %s188
      %s190 = sphi 0, %s188
      %s191 = sphi 0, %s190
      %s205 = sphi 0, %s191
      %s209 = sphi 0, %s209
      %s211 = sphi 0, %s209
      %s212 = sphi 0, %s211
      %s226 = sphi 0, %s212
      %s230 = sphi 0, %s230
      %s232 = sphi 0, %s230
      %s233 = sphi 0, %s232
      %s247 = sphi 0, %s233
      %s251 = sphi 0, %s251
      %s253 = sphi 0, %s251
      %s254 = sphi 0, %s253
      %s268 = sphi 0, %s254
      %s272 = sphi 0, %s272
      %s274 = sphi 0, %s272
      %s275 = sphi 0, %s274
      %s289 = sphi 0, %s275
      %s293 = sphi 0, %s293
      %s295 = sphi 0, %s293
      %s296 = sphi 0, %s295
      %s310 = sphi 0, %s296
      %s314 = sphi 0, %s314
      %s316 = sphi 0, %s314
      %s317 = sphi 0, %s316
      %s331 = sphi 0, %s317
      %s335 = sphi 0, %s335
      %s337 = sphi 0, %s335
      %s338 = sphi 0, %s337
      %s352 = sphi 0, %s338
      %s356 = sphi 0, %s356
      %s358 = sphi 0, %s356
      %s359 = sphi 0, %s358
      %s373 = sphi 0, %s359
      %s377 = sphi 0, %s377
      %s379 = sphi 0, %s377
      %s380 = sphi 0, %s379
      %s394 = sphi 0, %s380
      %s400 = sphi 0, %s402
      %s403 = sphi 0, %s400
      %s404 = sphi 0, %s403
      %s420 = sphi 0, %s404
    $region4: #{forward.1} parent=1 // loop_header_branch
      %31 = sbr.rel (%p29) target = $region8
    $region5: #{forward.1} parent=1 // loop_body
      %s33 = ssub.s32 %s28, 1
      %s34 = ssub.s32 %s28, 2
      %s35 = sadd.s32 %s28, 1
      %s36 = ssub.s32 %s28, %s35
      %p37 = scmp.eq.s32.totalorder %s36, 0
      %s39 = sadd.s32 %s38, 1
      %s40 = scalar_select %p37, %s38, %s39
      %p43 = pneg %p37
      %p44 = scmp.eq.s32.totalorder %s28, 1
      %p45 = por %p43, %p44
      %p46 = scmp.ne.s32.totalorder %s38, %s41
      %p47 = scmp.eq.s32.totalorder %s28, 0
      %p48 = por %p46, %p47
      %p49 = scmp.ne.s32.totalorder %s38, %s41
      %p50 = scmp.eq.s32.totalorder %s33, 1
      %p51 = por %p49, %p50
      %p52 = scmp.ne.s32.totalorder %s41, %s42
      %p53 = scmp.eq.s32.totalorder %s33, 0
      %p54 = por %p52, %p53
      %p55 = scmp.ne.s32.totalorder %s41, %s42
      %p56 = scmp.eq.s32.totalorder %s34, 1
      %p57 = por %p55, %p56
      %p59 = scmp.ne.s32.totalorder %s42, %s58
      %p60 = scmp.eq.s32.totalorder %s34, 0
      %p61 = por %p59, %p60
      %s63 = sadd.s32 %s62, 1
      %p66 = scmp.eq.s32.totalorder %s28, 1
      %p67 = scmp.ne.s32.totalorder %s62, %s64
      %p68 = scmp.eq.s32.totalorder %s28, 0
      %p69 = por %p67, %p68
      %p70 = scmp.ne.s32.totalorder %s62, %s64
      %p71 = scmp.eq.s32.totalorder %s33, 1
      %p72 = por %p70, %p71
      %p73 = scmp.ne.s32.totalorder %s64, %s65
      %p74 = scmp.eq.s32.totalorder %s33, 0
      %p75 = por %p73, %p74
      %p76 = scmp.ne.s32.totalorder %s64, %s65
      %p77 = scmp.eq.s32.totalorder %s34, 1
      %p78 = por %p76, %p77
      %p80 = scmp.ne.s32.totalorder %s65, %s79
      %p81 = scmp.eq.s32.totalorder %s34, 0
      %p82 = por %p80, %p81
      %s84 = sadd.s32 %s83, 1
      %p87 = scmp.eq.s32.totalorder %s28, 1
      %p88 = scmp.ne.s32.totalorder %s83, %s85
      %p89 = scmp.eq.s32.totalorder %s28, 0
      %p90 = por %p88, %p89
      %p91 = scmp.ne.s32.totalorder %s83, %s85
      %p92 = scmp.eq.s32.totalorder %s33, 1
      %p93 = por %p91, %p92
      %p94 = scmp.ne.s32.totalorder %s85, %s86
      %p95 = scmp.eq.s32.totalorder %s33, 0
      %p96 = por %p94, %p95
      %p97 = scmp.ne.s32.totalorder %s85, %s86
      %p98 = scmp.eq.s32.totalorder %s34, 1
      %p99 = por %p97, %p98
      %p101 = scmp.ne.s32.totalorder %s86, %s100
      %p102 = scmp.eq.s32.totalorder %s34, 0
      %p103 = por %p101, %p102
      %s105 = sadd.s32 %s104, 1
      %p108 = scmp.eq.s32.totalorder %s28, 1
      %p109 = scmp.ne.s32.totalorder %s104, %s106
      %p110 = scmp.eq.s32.totalorder %s28, 0
      %p111 = por %p109, %p110
      %p112 = scmp.ne.s32.totalorder %s104, %s106
      %p113 = scmp.eq.s32.totalorder %s33, 1
      %p114 = por %p112, %p113
      %p115 = scmp.ne.s32.totalorder %s106, %s107
      %p116 = scmp.eq.s32.totalorder %s33, 0
      %p117 = por %p115, %p116
      %p118 = scmp.ne.s32.totalorder %s106, %s107
      %p119 = scmp.eq.s32.totalorder %s34, 1
      %p120 = por %p118, %p119
      %p122 = scmp.ne.s32.totalorder %s107, %s121
      %p123 = scmp.eq.s32.totalorder %s34, 0
      %p124 = por %p122, %p123
      %s126 = sadd.s32 %s125, 1
      %p129 = scmp.eq.s32.totalorder %s28, 1
      %p130 = scmp.ne.s32.totalorder %s125, %s127
      %p131 = scmp.eq.s32.totalorder %s28, 0
      %p132 = por %p130, %p131
      %p133 = scmp.ne.s32.totalorder %s125, %s127
      %p134 = scmp.eq.s32.totalorder %s33, 1
      %p135 = por %p133, %p134
      %p136 = scmp.ne.s32.totalorder %s127, %s128
      %p137 = scmp.eq.s32.totalorder %s33, 0
      %p138 = por %p136, %p137
      %p139 = scmp.ne.s32.totalorder %s127, %s128
      %p140 = scmp.eq.s32.totalorder %s34, 1
      %p141 = por %p139, %p140
      %p143 = scmp.ne.s32.totalorder %s128, %s142
      %p144 = scmp.eq.s32.totalorder %s34, 0
      %p145 = por %p143, %p144
      %s147 = sadd.s32 %s146, 1
      %p150 = scmp.eq.s32.totalorder %s28, 1
      %p151 = scmp.ne.s32.totalorder %s146, %s148
      %p152 = scmp.eq.s32.totalorder %s28, 0
      %p153 = por %p151, %p152
      %p154 = scmp.ne.s32.totalorder %s146, %s148
      %p155 = scmp.eq.s32.totalorder %s33, 1
      %p156 = por %p154, %p155
      %p157 = scmp.ne.s32.totalorder %s148, %s149
      %p158 = scmp.eq.s32.totalorder %s33, 0
      %p159 = por %p157, %p158
      %p160 = scmp.ne.s32.totalorder %s148, %s149
      %p161 = scmp.eq.s32.totalorder %s34, 1
      %p162 = por %p160, %p161
      %p164 = scmp.ne.s32.totalorder %s149, %s163
      %p165 = scmp.eq.s32.totalorder %s34, 0
      %p166 = por %p164, %p165
      %s168 = sadd.s32 %s167, 1
      %p171 = scmp.eq.s32.totalorder %s28, 1
      %p172 = scmp.ne.s32.totalorder %s167, %s169
      %p173 = scmp.eq.s32.totalorder %s28, 0
      %p174 = por %p172, %p173
      %p175 = scmp.ne.s32.totalorder %s167, %s169
      %p176 = scmp.eq.s32.totalorder %s33, 1
      %p177 = por %p175, %p176
      %p178 = scmp.ne.s32.totalorder %s169, %s170
      %p179 = scmp.eq.s32.totalorder %s33, 0
      %p180 = por %p178, %p179
      %p181 = scmp.ne.s32.totalorder %s169, %s170
      %p182 = scmp.eq.s32.totalorder %s34, 1
      %p183 = por %p181, %p182
      %p185 = scmp.ne.s32.totalorder %s170, %s184
      %p186 = scmp.eq.s32.totalorder %s34, 0
      %p187 = por %p185, %p186
      %s189 = sadd.s32 %s188, 1
      %p192 = scmp.eq.s32.totalorder %s28, 1
      %p193 = scmp.ne.s32.totalorder %s188, %s190
      %p194 = scmp.eq.s32.totalorder %s28, 0
      %p195 = por %p193, %p194
      %p196 = scmp.ne.s32.totalorder %s188, %s190
      %p197 = scmp.eq.s32.totalorder %s33, 1
      %p198 = por %p196, %p197
      %p199 = scmp.ne.s32.totalorder %s190, %s191
      %p200 = scmp.eq.s32.totalorder %s33, 0
      %p201 = por %p199, %p200
      %p202 = scmp.ne.s32.totalorder %s190, %s191
      %p203 = scmp.eq.s32.totalorder %s34, 1
      %p204 = por %p202, %p203
      %p206 = scmp.ne.s32.totalorder %s191, %s205
      %p207 = scmp.eq.s32.totalorder %s34, 0
      %p208 = por %p206, %p207
      %s210 = sadd.s32 %s209, 1
      %p213 = scmp.eq.s32.totalorder %s28, 1
      %p214 = scmp.ne.s32.totalorder %s209, %s211
      %p215 = scmp.eq.s32.totalorder %s28, 0
      %p216 = por %p214, %p215
      %p217 = scmp.ne.s32.totalorder %s209, %s211
      %p218 = scmp.eq.s32.totalorder %s33, 1
      %p219 = por %p217, %p218
      %p220 = scmp.ne.s32.totalorder %s211, %s212
      %p221 = scmp.eq.s32.totalorder %s33, 0
      %p222 = por %p220, %p221
      %p223 = scmp.ne.s32.totalorder %s211, %s212
      %p224 = scmp.eq.s32.totalorder %s34, 1
      %p225 = por %p223, %p224
      %p227 = scmp.ne.s32.totalorder %s212, %s226
      %p228 = scmp.eq.s32.totalorder %s34, 0
      %p229 = por %p227, %p228
      %s231 = sadd.s32 %s230, 1
      %p234 = scmp.eq.s32.totalorder %s28, 1
      %p235 = scmp.ne.s32.totalorder %s230, %s232
      %p236 = scmp.eq.s32.totalorder %s28, 0
      %p237 = por %p235, %p236
      %p238 = scmp.ne.s32.totalorder %s230, %s232
      %p239 = scmp.eq.s32.totalorder %s33, 1
      %p240 = por %p238, %p239
      %p241 = scmp.ne.s32.totalorder %s232, %s233
      %p242 = scmp.eq.s32.totalorder %s33, 0
      %p243 = por %p241, %p242
      %p244 = scmp.ne.s32.totalorder %s232, %s233
      %p245 = scmp.eq.s32.totalorder %s34, 1
      %p246 = por %p244, %p245
      %p248 = scmp.ne.s32.totalorder %s233, %s247
      %p249 = scmp.eq.s32.totalorder %s34, 0
      %p250 = por %p248, %p249
      %s252 = sadd.s32 %s251, 1
      %p255 = scmp.eq.s32.totalorder %s28, 1
      %p256 = scmp.ne.s32.totalorder %s251, %s253
      %p257 = scmp.eq.s32.totalorder %s28, 0
      %p258 = por %p256, %p257
      %p259 = scmp.ne.s32.totalorder %s251, %s253
      %p260 = scmp.eq.s32.totalorder %s33, 1
      %p261 = por %p259, %p260
      %p262 = scmp.ne.s32.totalorder %s253, %s254
      %p263 = scmp.eq.s32.totalorder %s33, 0
      %p264 = por %p262, %p263
      %p265 = scmp.ne.s32.totalorder %s253, %s254
      %p266 = scmp.eq.s32.totalorder %s34, 1
      %p267 = por %p265, %p266
      %p269 = scmp.ne.s32.totalorder %s254, %s268
      %p270 = scmp.eq.s32.totalorder %s34, 0
      %p271 = por %p269, %p270
      %s273 = sadd.s32 %s272, 1
      %p276 = scmp.eq.s32.totalorder %s28, 1
      %p277 = scmp.ne.s32.totalorder %s272, %s274
      %p278 = scmp.eq.s32.totalorder %s28, 0
      %p279 = por %p277, %p278
      %p280 = scmp.ne.s32.totalorder %s272, %s274
      %p281 = scmp.eq.s32.totalorder %s33, 1
      %p282 = por %p280, %p281
      %p283 = scmp.ne.s32.totalorder %s274, %s275
      %p284 = scmp.eq.s32.totalorder %s33, 0
      %p285 = por %p283, %p284
      %p286 = scmp.ne.s32.totalorder %s274, %s275
      %p287 = scmp.eq.s32.totalorder %s34, 1
      %p288 = por %p286, %p287
      %p290 = scmp.ne.s32.totalorder %s275, %s289
      %p291 = scmp.eq.s32.totalorder %s34, 0
      %p292 = por %p290, %p291
      %s294 = sadd.s32 %s293, 1
      %p297 = scmp.eq.s32.totalorder %s28, 1
      %p298 = scmp.ne.s32.totalorder %s293, %s295
      %p299 = scmp.eq.s32.totalorder %s28, 0
      %p300 = por %p298, %p299
      %p301 = scmp.ne.s32.totalorder %s293, %s295
      %p302 = scmp.eq.s32.totalorder %s33, 1
      %p303 = por %p301, %p302
      %p304 = scmp.ne.s32.totalorder %s295, %s296
      %p305 = scmp.eq.s32.totalorder %s33, 0
      %p306 = por %p304, %p305
      %p307 = scmp.ne.s32.totalorder %s295, %s296
      %p308 = scmp.eq.s32.totalorder %s34, 1
      %p309 = por %p307, %p308
      %p311 = scmp.ne.s32.totalorder %s296, %s310
      %p312 = scmp.eq.s32.totalorder %s34, 0
      %p313 = por %p311, %p312
      %s315 = sadd.s32 %s314, 1
      %p318 = scmp.eq.s32.totalorder %s28, 1
      %p319 = scmp.ne.s32.totalorder %s314, %s316
      %p320 = scmp.eq.s32.totalorder %s28, 0
      %p321 = por %p319, %p320
      %p322 = scmp.ne.s32.totalorder %s314, %s316
      %p323 = scmp.eq.s32.totalorder %s33, 1
      %p324 = por %p322, %p323
      %p325 = scmp.ne.s32.totalorder %s316, %s317
      %p326 = scmp.eq.s32.totalorder %s33, 0
      %p327 = por %p325, %p326
      %p328 = scmp.ne.s32.totalorder %s316, %s317
      %p329 = scmp.eq.s32.totalorder %s34, 1
      %p330 = por %p328, %p329
      %p332 = scmp.ne.s32.totalorder %s317, %s331
      %p333 = scmp.eq.s32.totalorder %s34, 0
      %p334 = por %p332, %p333
      %s336 = sadd.s32 %s335, 1
      %p339 = scmp.eq.s32.totalorder %s28, 1
      %p340 = scmp.ne.s32.totalorder %s335, %s337
      %p341 = scmp.eq.s32.totalorder %s28, 0
      %p342 = por %p340, %p341
      %p343 = scmp.ne.s32.totalorder %s335, %s337
      %p344 = scmp.eq.s32.totalorder %s33, 1
      %p345 = por %p343, %p344
      %p346 = scmp.ne.s32.totalorder %s337, %s338
      %p347 = scmp.eq.s32.totalorder %s33, 0
      %p348 = por %p346, %p347
      %p349 = scmp.ne.s32.totalorder %s337, %s338
      %p350 = scmp.eq.s32.totalorder %s34, 1
      %p351 = por %p349, %p350
      %p353 = scmp.ne.s32.totalorder %s338, %s352
      %p354 = scmp.eq.s32.totalorder %s34, 0
      %p355 = por %p353, %p354
      %s357 = sadd.s32 %s356, 1
      %p360 = scmp.eq.s32.totalorder %s28, 1
      %p361 = scmp.ne.s32.totalorder %s356, %s358
      %p362 = scmp.eq.s32.totalorder %s28, 0
      %p363 = por %p361, %p362
      %p364 = scmp.ne.s32.totalorder %s356, %s358
      %p365 = scmp.eq.s32.totalorder %s33, 1
      %p366 = por %p364, %p365
      %p367 = scmp.ne.s32.totalorder %s358, %s359
      %p368 = scmp.eq.s32.totalorder %s33, 0
      %p369 = por %p367, %p368
      %p370 = scmp.ne.s32.totalorder %s358, %s359
      %p371 = scmp.eq.s32.totalorder %s34, 1
      %p372 = por %p370, %p371
      %p374 = scmp.ne.s32.totalorder %s359, %s373
      %p375 = scmp.eq.s32.totalorder %s34, 0
      %p376 = por %p374, %p375
      %s378 = sadd.s32 %s377, 1
      %p381 = scmp.eq.s32.totalorder %s28, 1
      %p382 = scmp.ne.s32.totalorder %s377, %s379
      %p383 = scmp.eq.s32.totalorder %s28, 0
      %p384 = por %p382, %p383
      %p385 = scmp.ne.s32.totalorder %s377, %s379
      %p386 = scmp.eq.s32.totalorder %s33, 1
      %p387 = por %p385, %p386
      %p388 = scmp.ne.s32.totalorder %s379, %s380
      %p389 = scmp.eq.s32.totalorder %s33, 0
      %p390 = por %p388, %p389
      %p391 = scmp.ne.s32.totalorder %s379, %s380
      %p392 = scmp.eq.s32.totalorder %s34, 1
      %p393 = por %p391, %p392
      %p395 = scmp.ne.s32.totalorder %s380, %s394
      %p396 = scmp.eq.s32.totalorder %s34, 0
      %p397 = por %p395, %p396
      %s398 = ssub.s32 %s28, %s35
      %p399 = scmp.eq.s32.totalorder %s398, 0
      %s401 = sadd.s32 %s400, 1
      %s402 = scalar_select %p399, %s400, %s401
      %p405 = pneg %p399
      %p406 = scmp.eq.s32.totalorder %s28, 1
      %p407 = por %p405, %p406
      %p408 = scmp.ne.s32.totalorder %s400, %s403
      %p409 = scmp.eq.s32.totalorder %s28, 0
      %p410 = por %p408, %p409
      %p411 = scmp.ne.s32.totalorder %s400, %s403
      %p412 = scmp.eq.s32.totalorder %s33, 1
      %p413 = por %p411, %p412
      %p414 = scmp.ne.s32.totalorder %s403, %s404
      %p415 = scmp.eq.s32.totalorder %s33, 0
      %p416 = por %p414, %p415
      %p417 = scmp.ne.s32.totalorder %s403, %s404
      %p418 = scmp.eq.s32.totalorder %s34, 1
      %p419 = por %p417, %p418
      %p421 = scmp.ne.s32.totalorder %s404, %s420
      %p422 = scmp.eq.s32.totalorder %s34, 0
      %p423 = por %p421, %p422
      %p424 = scmp.le.s32.totalorder 1, %s28
      %p425 = scmp.lt.s32.totalorder %s28, 3
      %p426 = pnand %p424, %p425
      %p427 = pneg %p426
      // Predicated region
      $region9: #{forward.1} parent=5 // pred_check
        _
      $region10: #{forward.1} parent=5 // pred_check_branch
        %429 = sbr.rel (%p426) target = $region12
      $region11: #{forward.1} parent=5 // pred_region
        %s430 = ssub.s32 %s28, 1
        // Predicated region
        $region13: #{forward.1} parent=11 // pred_check
          %p431 = pneg %p75
        $region14: #{forward.1} parent=11 // pred_check_branch
          %433 = sbr.rel (%p431) target = $region16
        $region15: #{forward.1} parent=11 // pred_region
          _
        $region16: #{forward.1} parent=11 // pred_fallthru
          _
        // Predicated region
        $region17: #{forward.1} parent=11 // pred_check
          %p434 = pneg %p96
        $region18: #{forward.1} parent=11 // pred_check_branch
          %436 = sbr.rel (%p434) target = $region20
        $region19: #{forward.1} parent=11 // pred_region
          _
        $region20: #{forward.1} parent=11 // pred_fallthru
          _
        // Predicated region
        $region21: #{forward.1} parent=11 // pred_check
          %p437 = pneg %p117
        $region22: #{forward.1} parent=11 // pred_check_branch
          %439 = sbr.rel (%p437) target = $region24
        $region23: #{forward.1} parent=11 // pred_region
          _
        $region24: #{forward.1} parent=11 // pred_fallthru
          _
        // Predicated region
        $region25: #{forward.1} parent=11 // pred_check
          %p440 = pneg %p138
        $region26: #{forward.1} parent=11 // pred_check_branch
          %442 = sbr.rel (%p440) target = $region28
        $region27: #{forward.1} parent=11 // pred_region
          _
        $region28: #{forward.1} parent=11 // pred_fallthru
          _
        // Predicated region
        $region29: #{forward.1} parent=11 // pred_check
          %p443 = pneg %p159
        $region30: #{forward.1} parent=11 // pred_check_branch
          %445 = sbr.rel (%p443) target = $region32
        $region31: #{forward.1} parent=11 // pred_region
          _
        $region32: #{forward.1} parent=11 // pred_fallthru
          _
        // Predicated region
        $region33: #{forward.1} parent=11 // pred_check
          %p446 = pneg %p180
        $region34: #{forward.1} parent=11 // pred_check_branch
          %448 = sbr.rel (%p446) target = $region36
        $region35: #{forward.1} parent=11 // pred_region
          _
        $region36: #{forward.1} parent=11 // pred_fallthru
          _
        // Predicated region
        $region37: #{forward.1} parent=11 // pred_check
          %p449 = pneg %p201
        $region38: #{forward.1} parent=11 // pred_check_branch
          %451 = sbr.rel (%p449) target = $region40
        $region39: #{forward.1} parent=11 // pred_region
          %s453 = ssub.s32 8192, 8192
          %454 = vsyncadd [#allocation4], %s453
          %s455 = sshll.u32 [#allocation3], 4
          %s456 = int_to_ptr.vmem [resolvable:$true] %s455
          %461 = dma.hbm_to_vmem [thread:$0]  %s7, 8192, %s456, [#allocation4], 256, 256, 16
        $region40: #{forward.1} parent=11 // pred_fallthru
          _
        // Predicated region
        $region41: #{forward.1} parent=11 // pred_check
          %p462 = pneg %p222
        $region42: #{forward.1} parent=11 // pred_check_branch
          %464 = sbr.rel (%p462) target = $region44
        $region43: #{forward.1} parent=11 // pred_region
          _
        $region44: #{forward.1} parent=11 // pred_fallthru
          _
        // Predicated region
        $region45: #{forward.1} parent=11 // pred_check
          %p465 = pneg %p243
        $region46: #{forward.1} parent=11 // pred_check_branch
          %467 = sbr.rel (%p465) target = $region48
        $region47: #{forward.1} parent=11 // pred_region
          %s469 = ssub.s32 8192, 8192
          %470 = vsyncadd [#allocation6], %s469
          %s471 = sshll.u32 [#allocation5], 4
          %s472 = int_to_ptr.vmem [resolvable:$true] %s471
          %477 = dma.hbm_to_vmem [thread:$0]  %s9, 8192, %s472, [#allocation6], 256, 256, 16
        $region48: #{forward.1} parent=11 // pred_fallthru
          _
        // Predicated region
        $region49: #{forward.1} parent=11 // pred_check
          %p478 = pneg %p264
        $region50: #{forward.1} parent=11 // pred_check_branch
          %480 = sbr.rel (%p478) target = $region52
        $region51: #{forward.1} parent=11 // pred_region
          _
        $region52: #{forward.1} parent=11 // pred_fallthru
          _
        // Predicated region
        $region53: #{forward.1} parent=11 // pred_check
          %p481 = pneg %p285
        $region54: #{forward.1} parent=11 // pred_check_branch
          %483 = sbr.rel (%p481) target = $region56
        $region55: #{forward.1} parent=11 // pred_region
          %s485 = ssub.s32 8192, 8192
          %486 = vsyncadd [#allocation6], %s485
          %s487 = sshll.u32 [#allocation7], 4
          %s488 = int_to_ptr.vmem [resolvable:$true] %s487
          %493 = dma.hbm_to_vmem [thread:$0]  %s11, 8192, %s488, [#allocation6], 256, 256, 16
        $region56: #{forward.1} parent=11 // pred_fallthru
          _
        // Predicated region
        $region57: #{forward.1} parent=11 // pred_check
          %p494 = pneg %p306
        $region58: #{forward.1} parent=11 // pred_check_branch
          %496 = sbr.rel (%p494) target = $region60
        $region59: #{forward.1} parent=11 // pred_region
          _
        $region60: #{forward.1} parent=11 // pred_fallthru
          _
        // Predicated region
        $region61: #{forward.1} parent=11 // pred_check
          %p497 = pneg %p327
        $region62: #{forward.1} parent=11 // pred_check_branch
          %499 = sbr.rel (%p497) target = $region64
        $region63: #{forward.1} parent=11 // pred_region
          %s501 = ssub.s32 8192, 8192
          %502 = vsyncadd [#allocation9], %s501
          %s503 = sshll.u32 [#allocation8], 4
          %s504 = int_to_ptr.vmem [resolvable:$true] %s503
          %509 = dma.hbm_to_vmem [thread:$0]  %s13, 8192, %s504, [#allocation9], 256, 256, 16
        $region64: #{forward.1} parent=11 // pred_fallthru
          _
        // Predicated region
        $region65: #{forward.1} parent=11 // pred_check
          %p510 = pneg %p348
        $region66: #{forward.1} parent=11 // pred_check_branch
          %512 = sbr.rel (%p510) target = $region68
        $region67: #{forward.1} parent=11 // pred_region
          _
        $region68: #{forward.1} parent=11 // pred_fallthru
          _
        // Predicated region
        $region69: #{forward.1} parent=11 // pred_check
          %p513 = pneg %p369
        $region70: #{forward.1} parent=11 // pred_check_branch
          %515 = sbr.rel (%p513) target = $region72
        $region71: #{forward.1} parent=11 // pred_region
          _
        $region72: #{forward.1} parent=11 // pred_fallthru
          _
        // Predicated region
        $region73: #{forward.1} parent=11 // pred_check
          %p516 = pneg %p390
        $region74: #{forward.1} parent=11 // pred_check_branch
          %518 = sbr.rel (%p516) target = $region76
        $region75: #{forward.1} parent=11 // pred_region
          _
        $region76: #{forward.1} parent=11 // pred_fallthru
          _
      $region12: #{forward.1} parent=5 // pred_fallthru
        _
      %p519 = scmp.lt.s32.totalorder %s28, 2
      // Predicated region
      $region77: #{forward.1} parent=5 // pred_check
        %p520 = pneg %p519
      $region78: #{forward.1} parent=5 // pred_check_branch
        %522 = sbr.rel (%p520) target = $region80
      $region79: #{forward.1} parent=5 // pred_region
        // Predicated region
        $region81: #{forward.1} parent=79 // pred_check
          %p523 = pneg %p48
        $region82: #{forward.1} parent=79 // pred_check_branch
          %525 = sbr.rel (%p523) target = $region84
        $region83: #{forward.1} parent=79 // pred_region
          %s526 = smul.u32 4, %s28
          %p527 = scmp.lt.s32.totalorder %s526, 7
          %s528 = scalar_select %p527, %s526, 7
          %s529 = smul.addr %s528, 8
          %s530 = scalar_lea.vmem %s0, %s529
          %s531 = smul.u32 4, %s28
        $region84: #{forward.1} parent=79 // pred_fallthru
          _
      $region80: #{forward.1} parent=5 // pred_fallthru
        _
      %p532 = scmp.le.s32.totalorder 1, %s28
      %p533 = scmp.lt.s32.totalorder %s28, 3
      %p534 = pnand %p532, %p533
      %p535 = pneg %p534
      // Predicated region
      $region85: #{forward.1} parent=5 // pred_check
        _
      $region86: #{forward.1} parent=5 // pred_check_branch
        %537 = sbr.rel (%p534) target = $region88
      $region87: #{forward.1} parent=5 // pred_region
        %s538 = ssub.s32 %s28, 1
        // Predicated region
        $region89: #{forward.1} parent=87 // pred_check
          %p539 = pneg %p201
        $region90: #{forward.1} parent=87 // pred_check_branch
          %541 = sbr.rel (%p539) target = $region92
        $region91: #{forward.1} parent=87 // pred_region
          %542 = dma.done [#allocation4], 8192
        $region92: #{forward.1} parent=87 // pred_fallthru
          _
        // Predicated region
        $region93: #{forward.1} parent=87 // pred_check
          %p543 = pneg %p243
        $region94: #{forward.1} parent=87 // pred_check_branch
          %545 = sbr.rel (%p543) target = $region96
        $region95: #{forward.1} parent=87 // pred_region
          %546 = dma.done [#allocation6], 8192
        $region96: #{forward.1} parent=87 // pred_fallthru
          _
        // Predicated region
        $region97: #{forward.1} parent=87 // pred_check
          %p547 = pneg %p285
        $region98: #{forward.1} parent=87 // pred_check_branch
          %549 = sbr.rel (%p547) target = $region100
        $region99: #{forward.1} parent=87 // pred_region
          %550 = dma.done [#allocation6], 8192
        $region100: #{forward.1} parent=87 // pred_fallthru
          _
        // Predicated region
        $region101: #{forward.1} parent=87 // pred_check
          %p551 = pneg %p327
        $region102: #{forward.1} parent=87 // pred_check_branch
          %553 = sbr.rel (%p551) target = $region104
        $region103: #{forward.1} parent=87 // pred_region
          %554 = dma.done [#allocation9], 8192
        $region104: #{forward.1} parent=87 // pred_fallthru
          _
        %s555 = smul.u32 4, %s33
        %p556 = scmp.lt.s32.totalorder %s555, 7
        %s557 = scalar_select %p556, %s555, 7
        %s558 = smul.addr %s557, 8
        %s559 = scalar_lea.vmem %s0, %s558
        %p560 = pneg %p54
        %p561 = pneg %p51
        %p562 = pneg %p75
        %p563 = pneg %p72
        %p564 = pneg %p96
        %p565 = pneg %p93
        %p566 = pneg %p117
        %p567 = pneg %p114
        %p568 = pneg %p138
        %p569 = pneg %p135
        %p570 = pneg %p159
        %p571 = pneg %p156
        %p572 = pneg %p180
        %p573 = pneg %p177
        %p574 = pneg %p201
        %p575 = pneg %p198
        %p576 = pneg %p222
        %p577 = pneg %p219
        %p578 = pneg %p243
        %p579 = pneg %p240
        %p580 = pneg %p264
        %p581 = pneg %p261
        %p582 = pneg %p285
        %p583 = pneg %p282
        %p584 = pneg %p306
        %p585 = pneg %p303
        %p586 = pneg %p327
        %p587 = pneg %p324
        %p588 = pneg %p348
        %p589 = pneg %p345
        %p590 = pneg %p369
        %p591 = pneg %p366
        %p592 = pneg %p390
        %p593 = pneg %p387
        %p594 = pneg %p416
        %p595 = pneg %p413
        %s596 = smul.u32 4, %s33
        %p597 = scmp.lt.s32.totalorder %s596, 7
        %s598 = scalar_select %p597, %s596, 7
        %s599 = smul.addr %s598, 8
        %s600 = scalar_lea.vmem %s17, %s599
        %s601 = smul.u32 4, %s33
        %p602 = scmp.lt.s32.totalorder %s601, 7
        %s603 = scalar_select %p602, %s601, 7
        %s604 = smul.addr %s603, 8
        %s605 = scalar_lea.vmem %s0, %s604
        %s606 = smul.u32 4, %s33
        %s607 = smul.u32 4, %s33
        %p608 = scmp.lt.s32.totalorder %s607, 7
        %s609 = scalar_select %p608, %s607, 7
        %s610 = smul.addr %s609, 8
        %s611 = scalar_lea.vmem %s17, %s610
        %s612 = smul.u32 4, %s33
        %v613 = vld [vmem:[%s605] sm:$0xff]
        %v614 = vld [vmem:[%s605 + $0x8] sm:$0xff]
        %v615 = vld [vmem:[%s605 + $0x10] sm:$0xff]
        %v616 = vld [vmem:[%s605 + $0x18] sm:$0xff]
        %v617 = vld [vmem:[%s1] sm:$0x3]
        %619 = vset.pattern.permute.xlu0 0
        %620 = vperm.xlu0 %619, %v613
        %v621 = vpop.permute.xlu0 %620
        %624 = vset.pattern.permute.xlu0 0
        %625 = vperm.xlu0 %624, %v614
        %v626 = vpop.permute.xlu0 %625
        %629 = vset.pattern.permute.xlu0 0
        %630 = vperm.xlu0 %629, %v615
        %v631 = vpop.permute.xlu0 %630
        %634 = vset.pattern.permute.xlu0 0
        %635 = vperm.xlu0 %634, %v616
        %v636 = vpop.permute.xlu0 %635
        %v639 = vlaneseq
        %v640 = vshrl.u32 %v639, 7
        %v641 = vsub.s32 0, %v640
        %v642 = vrot.slane %v617, %v641
        %v643 = vlaneseq
        %v644 = vshrl.u32 %v643, 7
        %v645 = vsub.s32 1, %v644
        %v646 = vrot.slane %v617, %v645
        %v649 = vmul.f32 %v621, %v642
        %v650 = vmul.f32 %v621, %v646
        %v651 = vmul.f32 %v626, %v642
        %v652 = vmul.f32 %v626, %v646
        %v653 = vmul.f32 %v631, %v642
        %v654 = vmul.f32 %v631, %v646
        %v655 = vmul.f32 %v636, %v642
        %v656 = vmul.f32 %v636, %v646
        %v657 = vld [vmem:[%s2] sm:$0x3]
        %v659 = vlaneseq
        %v660 = vshrl.u32 %v659, 7
        %v661 = vsub.s32 0, %v660
        %v662 = vrot.slane %v657, %v661
        %v663 = vlaneseq
        %v664 = vshrl.u32 %v663, 7
        %v665 = vsub.s32 1, %v664
        %v666 = vrot.slane %v657, %v665
        %v669 = vadd.f32 %v649, %v662
        %v670 = vadd.f32 %v650, %v666
        %v671 = vadd.f32 %v651, %v662
        %v672 = vadd.f32 %v652, %v666
        %v673 = vadd.f32 %v653, %v662
        %v674 = vadd.f32 %v654, %v666
        %v675 = vadd.f32 %v655, %v662
        %v676 = vadd.f32 %v656, %v666
        %v677 = vmax.f32 %v669, 0.0
        %v678 = vmax.f32 %v670, 0.0
        %v679 = vmax.f32 %v671, 0.0
        %v680 = vmax.f32 %v672, 0.0
        %v681 = vmax.f32 %v673, 0.0
        %v682 = vmax.f32 %v674, 0.0
        %v683 = vmax.f32 %v675, 0.0
        %v684 = vmax.f32 %v676, 0.0
        %v685 = vld [vmem:[%s3] sm:$0x3]
        %686 = vset.pattern.permute.xlu0 1
        %687 = vperm.xlu0 %686, %v613
        %v688 = vpop.permute.xlu0 %687
        %690 = vset.pattern.permute.xlu0 1
        %691 = vperm.xlu0 %690, %v614
        %v692 = vpop.permute.xlu0 %691
        %694 = vset.pattern.permute.xlu0 1
        %695 = vperm.xlu0 %694, %v615
        %v696 = vpop.permute.xlu0 %695
        %698 = vset.pattern.permute.xlu0 1
        %699 = vperm.xlu0 %698, %v616
        %v700 = vpop.permute.xlu0 %699
        %v703 = vlaneseq
        %v704 = vshrl.u32 %v703, 7
        %v705 = vsub.s32 0, %v704
        %v706 = vrot.slane %v685, %v705
        %v707 = vlaneseq
        %v708 = vshrl.u32 %v707, 7
        %v709 = vsub.s32 1, %v708
        %v710 = vrot.slane %v685, %v709
        %v713 = vmul.f32 %v688, %v706
        %v714 = vmul.f32 %v688, %v710
        %v715 = vmul.f32 %v692, %v706
        %v716 = vmul.f32 %v692, %v710
        %v717 = vmul.f32 %v696, %v706
        %v718 = vmul.f32 %v696, %v710
        %v719 = vmul.f32 %v700, %v706
        %v720 = vmul.f32 %v700, %v710
        %v721 = vld [vmem:[%s4] sm:$0x3]
        %v723 = vlaneseq
        %v724 = vshrl.u32 %v723, 7
        %v725 = vsub.s32 0, %v724
        %v726 = vrot.slane %v721, %v725
        %v727 = vlaneseq
        %v728 = vshrl.u32 %v727, 7
        %v729 = vsub.s32 1, %v728
        %v730 = vrot.slane %v721, %v729
        %v733 = vadd.f32 %v713, %v726
        %v734 = vadd.f32 %v714, %v730
        %v735 = vadd.f32 %v715, %v726
        %v736 = vadd.f32 %v716, %v730
        %v737 = vadd.f32 %v717, %v726
        %v738 = vadd.f32 %v718, %v730
        %v739 = vadd.f32 %v719, %v726
        %v740 = vadd.f32 %v720, %v730
        %v741 = vmax.f32 %v733, 0.0
        %v742 = vmax.f32 %v734, 0.0
        %v743 = vmax.f32 %v735, 0.0
        %v744 = vmax.f32 %v736, 0.0
        %v745 = vmax.f32 %v737, 0.0
        %v746 = vmax.f32 %v738, 0.0
        %v747 = vmax.f32 %v739, 0.0
        %v748 = vmax.f32 %v740, 0.0
        %v749 = vld [vmem:[%s5] sm:$0xf]
        %v750 = vld [vmem:[%s6] sm:$0x3]
        %751 = vset.pattern.permute.xlu0 2
        %752 = vperm.xlu0 %751, %v613
        %v753 = vpop.permute.xlu0 %752
        %755 = vset.pattern.permute.xlu0 2
        %756 = vperm.xlu0 %755, %v614
        %v757 = vpop.permute.xlu0 %756
        %759 = vset.pattern.permute.xlu0 2
        %760 = vperm.xlu0 %759, %v615
        %v761 = vpop.permute.xlu0 %760
        %763 = vset.pattern.permute.xlu0 2
        %764 = vperm.xlu0 %763, %v616
        %v765 = vpop.permute.xlu0 %764
        %v768 = vlaneseq
        %v769 = vshrl.u32 %v768, 7
        %v770 = vsub.s32 0, %v769
        %v771 = vrot.slane %v749, %v770
        %v772 = vlaneseq
        %v773 = vshrl.u32 %v772, 7
        %v774 = vsub.s32 2, %v773
        %v775 = vrot.slane %v749, %v774
        %v778 = vlaneseq
        %v779 = vshrl.u32 %v778, 7
        %v780 = vsub.s32 0, %v779
        %v781 = vrot.slane %v771, %v780
        %v782 = vlaneseq
        %v783 = vshrl.u32 %v782, 7
        %v784 = vsub.s32 0, %v783
        %v785 = vrot.slane %v775, %v784
        %v786 = vmul.f32 %v753, %v781
        %v787 = vmul.f32 %v753, %v785
        %v788 = vmul.f32 %v757, %v781
        %v789 = vmul.f32 %v757, %v785
        %v790 = vmul.f32 %v761, %v781
        %v791 = vmul.f32 %v761, %v785
        %v792 = vmul.f32 %v765, %v781
        %v793 = vmul.f32 %v765, %v785
        %v795 = vlaneseq
        %v796 = vshrl.u32 %v795, 7
        %v797 = vsub.s32 0, %v796
        %v798 = vrot.slane %v750, %v797
        %v799 = vlaneseq
        %v800 = vshrl.u32 %v799, 7
        %v801 = vsub.s32 1, %v800
        %v802 = vrot.slane %v750, %v801
        %v805 = vadd.f32 %v798, %v786
        %v806 = vadd.f32 %v802, %v787
        %v807 = vadd.f32 %v798, %v788
        %v808 = vadd.f32 %v802, %v789
        %v809 = vadd.f32 %v798, %v790
        %v810 = vadd.f32 %v802, %v791
        %v811 = vadd.f32 %v798, %v792
        %v812 = vadd.f32 %v802, %v793
        %813 = vset.pattern.permute.xlu0 3
        %814 = vperm.xlu0 %813, %v613
        %v815 = vpop.permute.xlu0 %814
        %817 = vset.pattern.permute.xlu0 3
        %818 = vperm.xlu0 %817, %v614
        %v819 = vpop.permute.xlu0 %818
        %821 = vset.pattern.permute.xlu0 3
        %822 = vperm.xlu0 %821, %v615
        %v823 = vpop.permute.xlu0 %822
        %825 = vset.pattern.permute.xlu0 3
        %826 = vperm.xlu0 %825, %v616
        %v827 = vpop.permute.xlu0 %826
        %v829 = vlaneseq
        %v830 = vshrl.u32 %v829, 7
        %v831 = vsub.s32 1, %v830
        %v832 = vrot.slane %v749, %v831
        %v833 = vlaneseq
        %v834 = vshrl.u32 %v833, 7
        %v835 = vsub.s32 3, %v834
        %v836 = vrot.slane %v749, %v835
        %v839 = vlaneseq
        %v840 = vshrl.u32 %v839, 7
        %v841 = vsub.s32 1, %v840
        %v842 = vrot.slane %v832, %v841
        %v843 = vlaneseq
        %v844 = vshrl.u32 %v843, 7
        %v845 = vsub.s32 1, %v844
        %v846 = vrot.slane %v836, %v845
        %v847 = vmul.f32 %v815, %v842
        %v848 = vmul.f32 %v815, %v846
        %v849 = vmul.f32 %v819, %v842
        %v850 = vmul.f32 %v819, %v846
        %v851 = vmul.f32 %v823, %v842
        %v852 = vmul.f32 %v823, %v846
        %v853 = vmul.f32 %v827, %v842
        %v854 = vmul.f32 %v827, %v846
        %v855 = vadd.f32 %v805, %v847
        %v856 = vadd.f32 %v806, %v848
        %v857 = vadd.f32 %v807, %v849
        %v858 = vadd.f32 %v808, %v850
        %v859 = vadd.f32 %v809, %v851
        %v860 = vadd.f32 %v810, %v852
        %v861 = vadd.f32 %v811, %v853
        %v862 = vadd.f32 %v812, %v854
        %v863 = vmax.f32 %v855, 0.0
        %v864 = vmax.f32 %v856, 0.0
        %v865 = vmax.f32 %v857, 0.0
        %v866 = vmax.f32 %v858, 0.0
        %v867 = vmax.f32 %v859, 0.0
        %v868 = vmax.f32 %v860, 0.0
        %v869 = vmax.f32 %v861, 0.0
        %v870 = vmax.f32 %v862, 0.0
        %v871 = vld [vmem:[#allocation3] sm:$0xff]
        %v872 = vld [vmem:[#allocation3 + $0x8] sm:$0xff]
        %v873 = vld [vmem:[#allocation3 + $0x10] sm:$0xff]
        %v874 = vld [vmem:[#allocation3 + $0x18] sm:$0xff]
        %v875 = vld [vmem:[#allocation3 + $0x20] sm:$0xff]
        %v876 = vld [vmem:[#allocation3 + $0x28] sm:$0xff]
        %v877 = vld [vmem:[#allocation3 + $0x30] sm:$0xff]
        %v878 = vld [vmem:[#allocation3 + $0x38] sm:$0xff]
        %v879 = vld [vmem:[#allocation3 + $0x40] sm:$0xff]
        %v880 = vld [vmem:[#allocation3 + $0x48] sm:$0xff]
        %v881 = vld [vmem:[#allocation3 + $0x50] sm:$0xff]
        %v882 = vld [vmem:[#allocation3 + $0x58] sm:$0xff]
        %v883 = vld [vmem:[#allocation3 + $0x60] sm:$0xff]
        %v884 = vld [vmem:[#allocation3 + $0x68] sm:$0xff]
        %v885 = vld [vmem:[#allocation3 + $0x70] sm:$0xff]
        %v886 = vld [vmem:[#allocation3 + $0x78] sm:$0xff]
        %v887 = vld [vmem:[#allocation3 + $0x80] sm:$0xff]
        %v888 = vld [vmem:[#allocation3 + $0x88] sm:$0xff]
        %v889 = vld [vmem:[#allocation3 + $0x90] sm:$0xff]
        %v890 = vld [vmem:[#allocation3 + $0x98] sm:$0xff]
        %v891 = vld [vmem:[#allocation3 + $0xa0] sm:$0xff]
        %v892 = vld [vmem:[#allocation3 + $0xa8] sm:$0xff]
        %v893 = vld [vmem:[#allocation3 + $0xb0] sm:$0xff]
        %v894 = vld [vmem:[#allocation3 + $0xb8] sm:$0xff]
        %v895 = vld [vmem:[#allocation3 + $0xc0] sm:$0xff]
        %v896 = vld [vmem:[#allocation3 + $0xc8] sm:$0xff]
        %v897 = vld [vmem:[#allocation3 + $0xd0] sm:$0xff]
        %v898 = vld [vmem:[#allocation3 + $0xd8] sm:$0xff]
        %v899 = vld [vmem:[#allocation3 + $0xe0] sm:$0xff]
        %v900 = vld [vmem:[#allocation3 + $0xe8] sm:$0xff]
        %v901 = vld [vmem:[#allocation3 + $0xf0] sm:$0xff]
        %v902 = vld [vmem:[#allocation3 + $0xf8] sm:$0xff]
        %v903 = vld [vmem:[#allocation3 + $0x100] sm:$0xff]
        %v904 = vld [vmem:[#allocation3 + $0x108] sm:$0xff]
        %v905 = vld [vmem:[#allocation3 + $0x110] sm:$0xff]
        %v906 = vld [vmem:[#allocation3 + $0x118] sm:$0xff]
        %v907 = vld [vmem:[#allocation3 + $0x120] sm:$0xff]
        %v908 = vld [vmem:[#allocation3 + $0x128] sm:$0xff]
        %v909 = vld [vmem:[#allocation3 + $0x130] sm:$0xff]
        %v910 = vld [vmem:[#allocation3 + $0x138] sm:$0xff]
        %v911 = vld [vmem:[#allocation3 + $0x140] sm:$0xff]
        %v912 = vld [vmem:[#allocation3 + $0x148] sm:$0xff]
        %v913 = vld [vmem:[#allocation3 + $0x150] sm:$0xff]
        %v914 = vld [vmem:[#allocation3 + $0x158] sm:$0xff]
        %v915 = vld [vmem:[#allocation3 + $0x160] sm:$0xff]
        %v916 = vld [vmem:[#allocation3 + $0x168] sm:$0xff]
        %v917 = vld [vmem:[#allocation3 + $0x170] sm:$0xff]
        %v918 = vld [vmem:[#allocation3 + $0x178] sm:$0xff]
        %v919 = vld [vmem:[#allocation3 + $0x180] sm:$0xff]
        %v920 = vld [vmem:[#allocation3 + $0x188] sm:$0xff]
        %v921 = vld [vmem:[#allocation3 + $0x190] sm:$0xff]
        %v922 = vld [vmem:[#allocation3 + $0x198] sm:$0xff]
        %v923 = vld [vmem:[#allocation3 + $0x1a0] sm:$0xff]
        %v924 = vld [vmem:[#allocation3 + $0x1a8] sm:$0xff]
        %v925 = vld [vmem:[#allocation3 + $0x1b0] sm:$0xff]
        %v926 = vld [vmem:[#allocation3 + $0x1b8] sm:$0xff]
        %v927 = vld [vmem:[#allocation3 + $0x1c0] sm:$0xff]
        %v928 = vld [vmem:[#allocation3 + $0x1c8] sm:$0xff]
        %v929 = vld [vmem:[#allocation3 + $0x1d0] sm:$0xff]
        %v930 = vld [vmem:[#allocation3 + $0x1d8] sm:$0xff]
        %v931 = vld [vmem:[#allocation3 + $0x1e0] sm:$0xff]
        %v932 = vld [vmem:[#allocation3 + $0x1e8] sm:$0xff]
        %v933 = vld [vmem:[#allocation3 + $0x1f0] sm:$0xff]
        %v934 = vld [vmem:[#allocation3 + $0x1f8] sm:$0xff]
        %v935 = vld [vmem:[%s8] sm:$0x3]
        %v937 = vlaneseq
        %v938 = vshrl.u32 %v937, 7
        %v939 = vsub.s32 0, %v938
        %v940 = vrot.slane %v935, %v939
        %v941 = vlaneseq
        %v942 = vshrl.u32 %v941, 7
        %v943 = vsub.s32 1, %v942
        %v944 = vrot.slane %v935, %v943
        %947 = vmatprep.subr.mxu0 %v872
        %948 = vmatpush1.msra.mxu0 %v871
        %949 = vmatprep.subr.mxu0 %v874
        %950 = vmatpush1.msra.mxu0 %v873
        %951 = vmatprep.subr.mxu0 %v876
        %952 = vmatpush1.msra.mxu0 %v875
        %953 = vmatprep.subr.mxu0 %v878
        %954 = vmatpush1.msra.mxu0 %v877
        %955 = vmatprep.subr.mxu0 %v880
        %956 = vmatpush1.msra.mxu0 %v879
        %957 = vmatprep.subr.mxu0 %v882
        %958 = vmatpush1.msra.mxu0 %v881
        %959 = vmatprep.subr.mxu0 %v884
        %960 = vmatpush1.msra.mxu0 %v883
        %961 = vmatprep.subr.mxu0 %v886
        %962 = vmatpush1.msra.mxu0 %v885
        %963 = vmatprep.subr.mxu0 %v888
        %964 = vmatpush1.msra.mxu0 %v887
        %965 = vmatprep.subr.mxu0 %v890
        %966 = vmatpush1.msra.mxu0 %v889
        %967 = vmatprep.subr.mxu0 %v892
        %968 = vmatpush1.msra.mxu0 %v891
        %969 = vmatprep.subr.mxu0 %v894
        %970 = vmatpush1.msra.mxu0 %v893
        %971 = vmatprep.subr.mxu0 %v896
        %972 = vmatpush1.msra.mxu0 %v895
        %973 = vmatprep.subr.mxu0 %v898
        %974 = vmatpush1.msra.mxu0 %v897
        %975 = vmatprep.subr.mxu0 %v900
        %976 = vmatpush1.msra.mxu0 %v899
        %977 = vmatprep.subr.mxu0 %v902
        %978 = vmatpush1.msra.mxu0 %v901
        %979 = vmatprep.subr.mxu0 %v904
        %980 = vmatpush1.msra.mxu0 %v903
        %981 = vmatprep.subr.mxu0 %v906
        %982 = vmatpush1.msra.mxu0 %v905
        %983 = vmatprep.subr.mxu0 %v908
        %984 = vmatpush1.msra.mxu0 %v907
        %985 = vmatprep.subr.mxu0 %v910
        %986 = vmatpush1.msra.mxu0 %v909
        %987 = vmatprep.subr.mxu0 %v912
        %988 = vmatpush1.msra.mxu0 %v911
        %989 = vmatprep.subr.mxu0 %v914
        %990 = vmatpush1.msra.mxu0 %v913
        %991 = vmatprep.subr.mxu0 %v916
        %992 = vmatpush1.msra.mxu0 %v915
        %993 = vmatprep.subr.mxu0 %v918
        %994 = vmatpush1.msra.mxu0 %v917
        %995 = vmatprep.subr.mxu0 %v920
        %996 = vmatpush1.msra.mxu0 %v919
        %997 = vmatprep.subr.mxu0 %v922
        %998 = vmatpush1.msra.mxu0 %v921
        %999 = vmatprep.subr.mxu0 %v924
        %1000 = vmatpush1.msra.mxu0 %v923
        %1001 = vmatprep.subr.mxu0 %v926
        %1002 = vmatpush1.msra.mxu0 %v925
        %1003 = vmatprep.subr.mxu0 %v928
        %1004 = vmatpush1.msra.mxu0 %v927
        %1005 = vmatprep.subr.mxu0 %v930
        %1006 = vmatpush1.msra.mxu0 %v929
        %1007 = vmatprep.subr.mxu0 %v932
        %1008 = vmatpush1.msra.mxu0 %v931
        %1009 = vmatprep.subr.mxu0 %v934
        %1010 = vmatpush1.msra.mxu0 %v933
        %1011 = vmatprep.mubr.f32.mxu0 %v678
        %1012 = vmatmul.mubr.f32.gmra.mrb[0].mxu0 %v677
        %v1013 = vpop.f32.mrb[0].mxu0
        %v1014 = vadd.f32 %v940, %v1013
        %v1015 = vpop.f32.mrb[0].mxu0
        %v1016 = vadd.f32 %v944, %v1015
        %1017 = vmatprep.mubr.f32.mxu0 %v680
        %1018 = vmatmul.mubr.f32.gmra.mrb[0].mxu0 %v679
        %v1019 = vpop.f32.mrb[0].mxu0
        %v1020 = vadd.f32 %v940, %v1019
        %v1021 = vpop.f32.mrb[0].mxu0
        %v1022 = vadd.f32 %v944, %v1021
        %1023 = vmatprep.mubr.f32.mxu0 %v682
        %1024 = vmatmul.mubr.f32.gmra.mrb[0].mxu0 %v681
        %v1025 = vpop.f32.mrb[0].mxu0
        %v1026 = vadd.f32 %v940, %v1025
        %v1027 = vpop.f32.mrb[0].mxu0
        %v1028 = vadd.f32 %v944, %v1027
        %1029 = vmatprep.mubr.f32.mxu0 %v684
        %1030 = vmatmul.mubr.f32.gmra.mrb[0].mxu0 %v683
        %v1031 = vpop.f32.mrb[0].mxu0
        %v1032 = vadd.f32 %v940, %v1031
        %v1033 = vpop.f32.mrb[0].mxu0
        %v1034 = vadd.f32 %v944, %v1033
        %1035 = vdwg.mxu0
        %v1036 = vmax.f32 %v1014, 0.0
        %v1037 = vmax.f32 %v1016, 0.0
        %v1038 = vmax.f32 %v1020, 0.0
        %v1039 = vmax.f32 %v1022, 0.0
        %v1040 = vmax.f32 %v1026, 0.0
        %v1041 = vmax.f32 %v1028, 0.0
        %v1042 = vmax.f32 %v1032, 0.0
        %v1043 = vmax.f32 %v1034, 0.0
        %v1044 = vld [vmem:[#allocation5] sm:$0xff]
        %v1045 = vld [vmem:[#allocation5 + $0x8] sm:$0xff]
        %v1046 = vld [vmem:[#allocation5 + $0x10] sm:$0xff]
        %v1047 = vld [vmem:[#allocation5 + $0x18] sm:$0xff]
        %v1048 = vld [vmem:[#allocation5 + $0x20] sm:$0xff]
        %v1049 = vld [vmem:[#allocation5 + $0x28] sm:$0xff]
        %v1050 = vld [vmem:[#allocation5 + $0x30] sm:$0xff]
        %v1051 = vld [vmem:[#allocation5 + $0x38] sm:$0xff]
        %v1052 = vld [vmem:[#allocation5 + $0x40] sm:$0xff]
        %v1053 = vld [vmem:[#allocation5 + $0x48] sm:$0xff]
        %v1054 = vld [vmem:[#allocation5 + $0x50] sm:$0xff]
        %v1055 = vld [vmem:[#allocation5 + $0x58] sm:$0xff]
        %v1056 = vld [vmem:[#allocation5 + $0x60] sm:$0xff]
        %v1057 = vld [vmem:[#allocation5 + $0x68] sm:$0xff]
        %v1058 = vld [vmem:[#allocation5 + $0x70] sm:$0xff]
        %v1059 = vld [vmem:[#allocation5 + $0x78] sm:$0xff]
        %v1060 = vld [vmem:[#allocation5 + $0x80] sm:$0xff]
        %v1061 = vld [vmem:[#allocation5 + $0x88] sm:$0xff]
        %v1062 = vld [vmem:[#allocation5 + $0x90] sm:$0xff]
        %v1063 = vld [vmem:[#allocation5 + $0x98] sm:$0xff]
        %v1064 = vld [vmem:[#allocation5 + $0xa0] sm:$0xff]
        %v1065 = vld [vmem:[#allocation5 + $0xa8] sm:$0xff]
        %v1066 = vld [vmem:[#allocation5 + $0xb0] sm:$0xff]
        %v1067 = vld [vmem:[#allocation5 + $0xb8] sm:$0xff]
        %v1068 = vld [vmem:[#allocation5 + $0xc0] sm:$0xff]
        %v1069 = vld [vmem:[#allocation5 + $0xc8] sm:$0xff]
        %v1070 = vld [vmem:[#allocation5 + $0xd0] sm:$0xff]
        %v1071 = vld [vmem:[#allocation5 + $0xd8] sm:$0xff]
        %v1072 = vld [vmem:[#allocation5 + $0xe0] sm:$0xff]
        %v1073 = vld [vmem:[#allocation5 + $0xe8] sm:$0xff]
        %v1074 = vld [vmem:[#allocation5 + $0xf0] sm:$0xff]
        %v1075 = vld [vmem:[#allocation5 + $0xf8] sm:$0xff]
        %v1076 = vld [vmem:[#allocation5 + $0x100] sm:$0xff]
        %v1077 = vld [vmem:[#allocation5 + $0x108] sm:$0xff]
        %v1078 = vld [vmem:[#allocation5 + $0x110] sm:$0xff]
        %v1079 = vld [vmem:[#allocation5 + $0x118] sm:$0xff]
        %v1080 = vld [vmem:[#allocation5 + $0x120] sm:$0xff]
        %v1081 = vld [vmem:[#allocation5 + $0x128] sm:$0xff]
        %v1082 = vld [vmem:[#allocation5 + $0x130] sm:$0xff]
        %v1083 = vld [vmem:[#allocation5 + $0x138] sm:$0xff]
        %v1084 = vld [vmem:[#allocation5 + $0x140] sm:$0xff]
        %v1085 = vld [vmem:[#allocation5 + $0x148] sm:$0xff]
        %v1086 = vld [vmem:[#allocation5 + $0x150] sm:$0xff]
        %v1087 = vld [vmem:[#allocation5 + $0x158] sm:$0xff]
        %v1088 = vld [vmem:[#allocation5 + $0x160] sm:$0xff]
        %v1089 = vld [vmem:[#allocation5 + $0x168] sm:$0xff]
        %v1090 = vld [vmem:[#allocation5 + $0x170] sm:$0xff]
        %v1091 = vld [vmem:[#allocation5 + $0x178] sm:$0xff]
        %v1092 = vld [vmem:[#allocation5 + $0x180] sm:$0xff]
        %v1093 = vld [vmem:[#allocation5 + $0x188] sm:$0xff]
        %v1094 = vld [vmem:[#allocation5 + $0x190] sm:$0xff]
        %v1095 = vld [vmem:[#allocation5 + $0x198] sm:$0xff]
        %v1096 = vld [vmem:[#allocation5 + $0x1a0] sm:$0xff]
        %v1097 = vld [vmem:[#allocation5 + $0x1a8] sm:$0xff]
        %v1098 = vld [vmem:[#allocation5 + $0x1b0] sm:$0xff]
        %v1099 = vld [vmem:[#allocation5 + $0x1b8] sm:$0xff]
        %v1100 = vld [vmem:[#allocation5 + $0x1c0] sm:$0xff]
        %v1101 = vld [vmem:[#allocation5 + $0x1c8] sm:$0xff]
        %v1102 = vld [vmem:[#allocation5 + $0x1d0] sm:$0xff]
        %v1103 = vld [vmem:[#allocation5 + $0x1d8] sm:$0xff]
        %v1104 = vld [vmem:[#allocation5 + $0x1e0] sm:$0xff]
        %v1105 = vld [vmem:[#allocation5 + $0x1e8] sm:$0xff]
        %v1106 = vld [vmem:[#allocation5 + $0x1f0] sm:$0xff]
        %v1107 = vld [vmem:[#allocation5 + $0x1f8] sm:$0xff]
        %v1108 = vld [vmem:[%s10] sm:$0x3]
        %v1110 = vlaneseq
        %v1111 = vshrl.u32 %v1110, 7
        %v1112 = vsub.s32 0, %v1111
        %v1113 = vrot.slane %v1108, %v1112
        %v1114 = vlaneseq
        %v1115 = vshrl.u32 %v1114, 7
        %v1116 = vsub.s32 1, %v1115
        %v1117 = vrot.slane %v1108, %v1116
        %1120 = vmatprep.subr.mxu0 %v1045
        %1121 = vmatpush1.msra.mxu0 %v1044
        %1122 = vmatprep.subr.mxu0 %v1047
        %1123 = vmatpush1.msra.mxu0 %v1046
        %1124 = vmatprep.subr.mxu0 %v1049
        %1125 = vmatpush1.msra.mxu0 %v1048
        %1126 = vmatprep.subr.mxu0 %v1051
        %1127 = vmatpush1.msra.mxu0 %v1050
        %1128 = vmatprep.subr.mxu0 %v1053
        %1129 = vmatpush1.msra.mxu0 %v1052
        %1130 = vmatprep.subr.mxu0 %v1055
        %1131 = vmatpush1.msra.mxu0 %v1054
        %1132 = vmatprep.subr.mxu0 %v1057
        %1133 = vmatpush1.msra.mxu0 %v1056
        %1134 = vmatprep.subr.mxu0 %v1059
        %1135 = vmatpush1.msra.mxu0 %v1058
        %1136 = vmatprep.subr.mxu0 %v1061
        %1137 = vmatpush1.msra.mxu0 %v1060
        %1138 = vmatprep.subr.mxu0 %v1063
        %1139 = vmatpush1.msra.mxu0 %v1062
        %1140 = vmatprep.subr.mxu0 %v1065
        %1141 = vmatpush1.msra.mxu0 %v1064
        %1142 = vmatprep.subr.mxu0 %v1067
        %1143 = vmatpush1.msra.mxu0 %v1066
        %1144 = vmatprep.subr.mxu0 %v1069
        %1145 = vmatpush1.msra.mxu0 %v1068
        %1146 = vmatprep.subr.mxu0 %v1071
        %1147 = vmatpush1.msra.mxu0 %v1070
        %1148 = vmatprep.subr.mxu0 %v1073
        %1149 = vmatpush1.msra.mxu0 %v1072
        %1150 = vmatprep.subr.mxu0 %v1075
        %1151 = vmatpush1.msra.mxu0 %v1074
        %1152 = vmatprep.subr.mxu0 %v1077
        %1153 = vmatpush1.msra.mxu0 %v1076
        %1154 = vmatprep.subr.mxu0 %v1079
        %1155 = vmatpush1.msra.mxu0 %v1078
        %1156 = vmatprep.subr.mxu0 %v1081
        %1157 = vmatpush1.msra.mxu0 %v1080
        %1158 = vmatprep.subr.mxu0 %v1083
        %1159 = vmatpush1.msra.mxu0 %v1082
        %1160 = vmatprep.subr.mxu0 %v1085
        %1161 = vmatpush1.msra.mxu0 %v1084
        %1162 = vmatprep.subr.mxu0 %v1087
        %1163 = vmatpush1.msra.mxu0 %v1086
        %1164 = vmatprep.subr.mxu0 %v1089
        %1165 = vmatpush1.msra.mxu0 %v1088
        %1166 = vmatprep.subr.mxu0 %v1091
        %1167 = vmatpush1.msra.mxu0 %v1090
        %1168 = vmatprep.subr.mxu0 %v1093
        %1169 = vmatpush1.msra.mxu0 %v1092
        %1170 = vmatprep.subr.mxu0 %v1095
        %1171 = vmatpush1.msra.mxu0 %v1094
        %1172 = vmatprep.subr.mxu0 %v1097
        %1173 = vmatpush1.msra.mxu0 %v1096
        %1174 = vmatprep.subr.mxu0 %v1099
        %1175 = vmatpush1.msra.mxu0 %v1098
        %1176 = vmatprep.subr.mxu0 %v1101
        %1177 = vmatpush1.msra.mxu0 %v1100
        %1178 = vmatprep.subr.mxu0 %v1103
        %1179 = vmatpush1.msra.mxu0 %v1102
        %1180 = vmatprep.subr.mxu0 %v1105
        %1181 = vmatpush1.msra.mxu0 %v1104
        %1182 = vmatprep.subr.mxu0 %v1107
        %1183 = vmatpush1.msra.mxu0 %v1106
        %1184 = vmatprep.mubr.f32.mxu0 %v742
        %1185 = vmatmul.mubr.f32.gmra.mrb[0].mxu0 %v741
        %v1186 = vpop.f32.mrb[0].mxu0
        %v1187 = vadd.f32 %v1113, %v1186
        %v1188 = vpop.f32.mrb[0].mxu0
        %v1189 = vadd.f32 %v1117, %v1188
        %1190 = vmatprep.mubr.f32.mxu0 %v744
        %1191 = vmatmul.mubr.f32.gmra.mrb[0].mxu0 %v743
        %v1192 = vpop.f32.mrb[0].mxu0
        %v1193 = vadd.f32 %v1113, %v1192
        %v1194 = vpop.f32.mrb[0].mxu0
        %v1195 = vadd.f32 %v1117, %v1194
        %1196 = vmatprep.mubr.f32.mxu0 %v746
        %1197 = vmatmul.mubr.f32.gmra.mrb[0].mxu0 %v745
        %v1198 = vpop.f32.mrb[0].mxu0
        %v1199 = vadd.f32 %v1113, %v1198
        %v1200 = vpop.f32.mrb[0].mxu0
        %v1201 = vadd.f32 %v1117, %v1200
        %1202 = vmatprep.mubr.f32.mxu0 %v748
        %1203 = vmatmul.mubr.f32.gmra.mrb[0].mxu0 %v747
        %v1204 = vpop.f32.mrb[0].mxu0
        %v1205 = vadd.f32 %v1113, %v1204
        %v1206 = vpop.f32.mrb[0].mxu0
        %v1207 = vadd.f32 %v1117, %v1206
        %1208 = vdwg.mxu0
        %v1209 = vmax.f32 %v1187, 0.0
        %v1210 = vmax.f32 %v1189, 0.0
        %v1211 = vmax.f32 %v1193, 0.0
        %v1212 = vmax.f32 %v1195, 0.0
        %v1213 = vmax.f32 %v1199, 0.0
        %v1214 = vmax.f32 %v1201, 0.0
        %v1215 = vmax.f32 %v1205, 0.0
        %v1216 = vmax.f32 %v1207, 0.0
        %v1217 = vadd.f32 %v1036, %v1209
        %v1218 = vadd.f32 %v1037, %v1210
        %v1219 = vadd.f32 %v1038, %v1211
        %v1220 = vadd.f32 %v1039, %v1212
        %v1221 = vadd.f32 %v1040, %v1213
        %v1222 = vadd.f32 %v1041, %v1214
        %v1223 = vadd.f32 %v1042, %v1215
        %v1224 = vadd.f32 %v1043, %v1216
        %v1225 = vld [vmem:[#allocation7] sm:$0xff]
        %v1226 = vld [vmem:[#allocation7 + $0x8] sm:$0xff]
        %v1227 = vld [vmem:[#allocation7 + $0x10] sm:$0xff]
        %v1228 = vld [vmem:[#allocation7 + $0x18] sm:$0xff]
        %v1229 = vld [vmem:[#allocation7 + $0x20] sm:$0xff]
        %v1230 = vld [vmem:[#allocation7 + $0x28] sm:$0xff]
        %v1231 = vld [vmem:[#allocation7 + $0x30] sm:$0xff]
        %v1232 = vld [vmem:[#allocation7 + $0x38] sm:$0xff]
        %v1233 = vld [vmem:[#allocation7 + $0x40] sm:$0xff]
        %v1234 = vld [vmem:[#allocation7 + $0x48] sm:$0xff]
        %v1235 = vld [vmem:[#allocation7 + $0x50] sm:$0xff]
        %v1236 = vld [vmem:[#allocation7 + $0x58] sm:$0xff]
        %v1237 = vld [vmem:[#allocation7 + $0x60] sm:$0xff]
        %v1238 = vld [vmem:[#allocation7 + $0x68] sm:$0xff]
        %v1239 = vld [vmem:[#allocation7 + $0x70] sm:$0xff]
        %v1240 = vld [vmem:[#allocation7 + $0x78] sm:$0xff]
        %v1241 = vld [vmem:[#allocation7 + $0x80] sm:$0xff]
        %v1242 = vld [vmem:[#allocation7 + $0x88] sm:$0xff]
        %v1243 = vld [vmem:[#allocation7 + $0x90] sm:$0xff]
        %v1244 = vld [vmem:[#allocation7 + $0x98] sm:$0xff]
        %v1245 = vld [vmem:[#allocation7 + $0xa0] sm:$0xff]
        %v1246 = vld [vmem:[#allocation7 + $0xa8] sm:$0xff]
        %v1247 = vld [vmem:[#allocation7 + $0xb0] sm:$0xff]
        %v1248 = vld [vmem:[#allocation7 + $0xb8] sm:$0xff]
        %v1249 = vld [vmem:[#allocation7 + $0xc0] sm:$0xff]
        %v1250 = vld [vmem:[#allocation7 + $0xc8] sm:$0xff]
        %v1251 = vld [vmem:[#allocation7 + $0xd0] sm:$0xff]
        %v1252 = vld [vmem:[#allocation7 + $0xd8] sm:$0xff]
        %v1253 = vld [vmem:[#allocation7 + $0xe0] sm:$0xff]
        %v1254 = vld [vmem:[#allocation7 + $0xe8] sm:$0xff]
        %v1255 = vld [vmem:[#allocation7 + $0xf0] sm:$0xff]
        %v1256 = vld [vmem:[#allocation7 + $0xf8] sm:$0xff]
        %v1257 = vld [vmem:[#allocation7 + $0x100] sm:$0xff]
        %v1258 = vld [vmem:[#allocation7 + $0x108] sm:$0xff]
        %v1259 = vld [vmem:[#allocation7 + $0x110] sm:$0xff]
        %v1260 = vld [vmem:[#allocation7 + $0x118] sm:$0xff]
        %v1261 = vld [vmem:[#allocation7 + $0x120] sm:$0xff]
        %v1262 = vld [vmem:[#allocation7 + $0x128] sm:$0xff]
        %v1263 = vld [vmem:[#allocation7 + $0x130] sm:$0xff]
        %v1264 = vld [vmem:[#allocation7 + $0x138] sm:$0xff]
        %v1265 = vld [vmem:[#allocation7 + $0x140] sm:$0xff]
        %v1266 = vld [vmem:[#allocation7 + $0x148] sm:$0xff]
        %v1267 = vld [vmem:[#allocation7 + $0x150] sm:$0xff]
        %v1268 = vld [vmem:[#allocation7 + $0x158] sm:$0xff]
        %v1269 = vld [vmem:[#allocation7 + $0x160] sm:$0xff]
        %v1270 = vld [vmem:[#allocation7 + $0x168] sm:$0xff]
        %v1271 = vld [vmem:[#allocation7 + $0x170] sm:$0xff]
        %v1272 = vld [vmem:[#allocation7 + $0x178] sm:$0xff]
        %v1273 = vld [vmem:[#allocation7 + $0x180] sm:$0xff]
        %v1274 = vld [vmem:[#allocation7 + $0x188] sm:$0xff]
        %v1275 = vld [vmem:[#allocation7 + $0x190] sm:$0xff]
        %v1276 = vld [vmem:[#allocation7 + $0x198] sm:$0xff]
        %v1277 = vld [vmem:[#allocation7 + $0x1a0] sm:$0xff]
        %v1278 = vld [vmem:[#allocation7 + $0x1a8] sm:$0xff]
        %v1279 = vld [vmem:[#allocation7 + $0x1b0] sm:$0xff]
        %v1280 = vld [vmem:[#allocation7 + $0x1b8] sm:$0xff]
        %v1281 = vld [vmem:[#allocation7 + $0x1c0] sm:$0xff]
        %v1282 = vld [vmem:[#allocation7 + $0x1c8] sm:$0xff]
        %v1283 = vld [vmem:[#allocation7 + $0x1d0] sm:$0xff]
        %v1284 = vld [vmem:[#allocation7 + $0x1d8] sm:$0xff]
        %v1285 = vld [vmem:[#allocation7 + $0x1e0] sm:$0xff]
        %v1286 = vld [vmem:[#allocation7 + $0x1e8] sm:$0xff]
        %v1287 = vld [vmem:[#allocation7 + $0x1f0] sm:$0xff]
        %v1288 = vld [vmem:[#allocation7 + $0x1f8] sm:$0xff]
        %v1289 = vld [vmem:[%s12] sm:$0x3]
        %v1291 = vlaneseq
        %v1292 = vshrl.u32 %v1291, 7
        %v1293 = vsub.s32 0, %v1292
        %v1294 = vrot.slane %v1289, %v1293
        %v1295 = vlaneseq
        %v1296 = vshrl.u32 %v1295, 7
        %v1297 = vsub.s32 1, %v1296
        %v1298 = vrot.slane %v1289, %v1297
        %1301 = vmatprep.subr.mxu0 %v1226
        %1302 = vmatpush1.msra.mxu0 %v1225
        %1303 = vmatprep.subr.mxu0 %v1228
        %1304 = vmatpush1.msra.mxu0 %v1227
        %1305 = vmatprep.subr.mxu0 %v1230
        %1306 = vmatpush1.msra.mxu0 %v1229
        %1307 = vmatprep.subr.mxu0 %v1232
        %1308 = vmatpush1.msra.mxu0 %v1231
        %1309 = vmatprep.subr.mxu0 %v1234
        %1310 = vmatpush1.msra.mxu0 %v1233
        %1311 = vmatprep.subr.mxu0 %v1236
        %1312 = vmatpush1.msra.mxu0 %v1235
        %1313 = vmatprep.subr.mxu0 %v1238
        %1314 = vmatpush1.msra.mxu0 %v1237
        %1315 = vmatprep.subr.mxu0 %v1240
        %1316 = vmatpush1.msra.mxu0 %v1239
        %1317 = vmatprep.subr.mxu0 %v1242
        %1318 = vmatpush1.msra.mxu0 %v1241
        %1319 = vmatprep.subr.mxu0 %v1244
        %1320 = vmatpush1.msra.mxu0 %v1243
        %1321 = vmatprep.subr.mxu0 %v1246
        %1322 = vmatpush1.msra.mxu0 %v1245
        %1323 = vmatprep.subr.mxu0 %v1248
        %1324 = vmatpush1.msra.mxu0 %v1247
        %1325 = vmatprep.subr.mxu0 %v1250
        %1326 = vmatpush1.msra.mxu0 %v1249
        %1327 = vmatprep.subr.mxu0 %v1252
        %1328 = vmatpush1.msra.mxu0 %v1251
        %1329 = vmatprep.subr.mxu0 %v1254
        %1330 = vmatpush1.msra.mxu0 %v1253
        %1331 = vmatprep.subr.mxu0 %v1256
        %1332 = vmatpush1.msra.mxu0 %v1255
        %1333 = vmatprep.subr.mxu0 %v1258
        %1334 = vmatpush1.msra.mxu0 %v1257
        %1335 = vmatprep.subr.mxu0 %v1260
        %1336 = vmatpush1.msra.mxu0 %v1259
        %1337 = vmatprep.subr.mxu0 %v1262
        %1338 = vmatpush1.msra.mxu0 %v1261
        %1339 = vmatprep.subr.mxu0 %v1264
        %1340 = vmatpush1.msra.mxu0 %v1263
        %1341 = vmatprep.subr.mxu0 %v1266
        %1342 = vmatpush1.msra.mxu0 %v1265
        %1343 = vmatprep.subr.mxu0 %v1268
        %1344 = vmatpush1.msra.mxu0 %v1267
        %1345 = vmatprep.subr.mxu0 %v1270
        %1346 = vmatpush1.msra.mxu0 %v1269
        %1347 = vmatprep.subr.mxu0 %v1272
        %1348 = vmatpush1.msra.mxu0 %v1271
        %1349 = vmatprep.subr.mxu0 %v1274
        %1350 = vmatpush1.msra.mxu0 %v1273
        %1351 = vmatprep.subr.mxu0 %v1276
        %1352 = vmatpush1.msra.mxu0 %v1275
        %1353 = vmatprep.subr.mxu0 %v1278
        %1354 = vmatpush1.msra.mxu0 %v1277
        %1355 = vmatprep.subr.mxu0 %v1280
        %1356 = vmatpush1.msra.mxu0 %v1279
        %1357 = vmatprep.subr.mxu0 %v1282
        %1358 = vmatpush1.msra.mxu0 %v1281
        %1359 = vmatprep.subr.mxu0 %v1284
        %1360 = vmatpush1.msra.mxu0 %v1283
        %1361 = vmatprep.subr.mxu0 %v1286
        %1362 = vmatpush1.msra.mxu0 %v1285
        %1363 = vmatprep.subr.mxu0 %v1288
        %1364 = vmatpush1.msra.mxu0 %v1287
        %1365 = vmatprep.mubr.f32.mxu0 %v864
        %1366 = vmatmul.mubr.f32.gmra.mrb[0].mxu0 %v863
        %v1367 = vpop.f32.mrb[0].mxu0
        %v1368 = vadd.f32 %v1294, %v1367
        %v1369 = vpop.f32.mrb[0].mxu0
        %v1370 = vadd.f32 %v1298, %v1369
        %1371 = vmatprep.mubr.f32.mxu0 %v866
        %1372 = vmatmul.mubr.f32.gmra.mrb[0].mxu0 %v865
        %v1373 = vpop.f32.mrb[0].mxu0
        %v1374 = vadd.f32 %v1294, %v1373
        %v1375 = vpop.f32.mrb[0].mxu0
        %v1376 = vadd.f32 %v1298, %v1375
        %1377 = vmatprep.mubr.f32.mxu0 %v868
        %1378 = vmatmul.mubr.f32.gmra.mrb[0].mxu0 %v867
        %v1379 = vpop.f32.mrb[0].mxu0
        %v1380 = vadd.f32 %v1294, %v1379
        %v1381 = vpop.f32.mrb[0].mxu0
        %v1382 = vadd.f32 %v1298, %v1381
        %1383 = vmatprep.mubr.f32.mxu0 %v870
        %1384 = vmatmul.mubr.f32.gmra.mrb[0].mxu0 %v869
        %v1385 = vpop.f32.mrb[0].mxu0
        %v1386 = vadd.f32 %v1294, %v1385
        %v1387 = vpop.f32.mrb[0].mxu0
        %v1388 = vadd.f32 %v1298, %v1387
        %1389 = vdwg.mxu0
        %v1390 = vmax.f32 %v1368, 0.0
        %v1391 = vmax.f32 %v1370, 0.0
        %v1392 = vmax.f32 %v1374, 0.0
        %v1393 = vmax.f32 %v1376, 0.0
        %v1394 = vmax.f32 %v1380, 0.0
        %v1395 = vmax.f32 %v1382, 0.0
        %v1396 = vmax.f32 %v1386, 0.0
        %v1397 = vmax.f32 %v1388, 0.0
        %v1398 = vadd.f32 %v1217, %v1390
        %v1399 = vadd.f32 %v1218, %v1391
        %v1400 = vadd.f32 %v1219, %v1392
        %v1401 = vadd.f32 %v1220, %v1393
        %v1402 = vadd.f32 %v1221, %v1394
        %v1403 = vadd.f32 %v1222, %v1395
        %v1404 = vadd.f32 %v1223, %v1396
        %v1405 = vadd.f32 %v1224, %v1397
        %v1406 = vld [vmem:[#allocation8] sm:$0xff]
        %v1407 = vld [vmem:[#allocation8 + $0x8] sm:$0xff]
        %v1408 = vld [vmem:[#allocation8 + $0x10] sm:$0xff]
        %v1409 = vld [vmem:[#allocation8 + $0x18] sm:$0xff]
        %v1410 = vld [vmem:[#allocation8 + $0x20] sm:$0xff]
        %v1411 = vld [vmem:[#allocation8 + $0x28] sm:$0xff]
        %v1412 = vld [vmem:[#allocation8 + $0x30] sm:$0xff]
        %v1413 = vld [vmem:[#allocation8 + $0x38] sm:$0xff]
        %v1414 = vld [vmem:[#allocation8 + $0x40] sm:$0xff]
        %v1415 = vld [vmem:[#allocation8 + $0x48] sm:$0xff]
        %v1416 = vld [vmem:[#allocation8 + $0x50] sm:$0xff]
        %v1417 = vld [vmem:[#allocation8 + $0x58] sm:$0xff]
        %v1418 = vld [vmem:[#allocation8 + $0x60] sm:$0xff]
        %v1419 = vld [vmem:[#allocation8 + $0x68] sm:$0xff]
        %v1420 = vld [vmem:[#allocation8 + $0x70] sm:$0xff]
        %v1421 = vld [vmem:[#allocation8 + $0x78] sm:$0xff]
        %v1422 = vld [vmem:[#allocation8 + $0x80] sm:$0xff]
        %v1423 = vld [vmem:[#allocation8 + $0x88] sm:$0xff]
        %v1424 = vld [vmem:[#allocation8 + $0x90] sm:$0xff]
        %v1425 = vld [vmem:[#allocation8 + $0x98] sm:$0xff]
        %v1426 = vld [vmem:[#allocation8 + $0xa0] sm:$0xff]
        %v1427 = vld [vmem:[#allocation8 + $0xa8] sm:$0xff]
        %v1428 = vld [vmem:[#allocation8 + $0xb0] sm:$0xff]
        %v1429 = vld [vmem:[#allocation8 + $0xb8] sm:$0xff]
        %v1430 = vld [vmem:[#allocation8 + $0xc0] sm:$0xff]
        %v1431 = vld [vmem:[#allocation8 + $0xc8] sm:$0xff]
        %v1432 = vld [vmem:[#allocation8 + $0xd0] sm:$0xff]
        %v1433 = vld [vmem:[#allocation8 + $0xd8] sm:$0xff]
        %v1434 = vld [vmem:[#allocation8 + $0xe0] sm:$0xff]
        %v1435 = vld [vmem:[#allocation8 + $0xe8] sm:$0xff]
        %v1436 = vld [vmem:[#allocation8 + $0xf0] sm:$0xff]
        %v1437 = vld [vmem:[#allocation8 + $0xf8] sm:$0xff]
        %v1438 = vld [vmem:[#allocation8 + $0x100] sm:$0xff]
        %v1439 = vld [vmem:[#allocation8 + $0x108] sm:$0xff]
        %v1440 = vld [vmem:[#allocation8 + $0x110] sm:$0xff]
        %v1441 = vld [vmem:[#allocation8 + $0x118] sm:$0xff]
        %v1442 = vld [vmem:[#allocation8 + $0x120] sm:$0xff]
        %v1443 = vld [vmem:[#allocation8 + $0x128] sm:$0xff]
        %v1444 = vld [vmem:[#allocation8 + $0x130] sm:$0xff]
        %v1445 = vld [vmem:[#allocation8 + $0x138] sm:$0xff]
        %v1446 = vld [vmem:[#allocation8 + $0x140] sm:$0xff]
        %v1447 = vld [vmem:[#allocation8 + $0x148] sm:$0xff]
        %v1448 = vld [vmem:[#allocation8 + $0x150] sm:$0xff]
        %v1449 = vld [vmem:[#allocation8 + $0x158] sm:$0xff]
        %v1450 = vld [vmem:[#allocation8 + $0x160] sm:$0xff]
        %v1451 = vld [vmem:[#allocation8 + $0x168] sm:$0xff]
        %v1452 = vld [vmem:[#allocation8 + $0x170] sm:$0xff]
        %v1453 = vld [vmem:[#allocation8 + $0x178] sm:$0xff]
        %v1454 = vld [vmem:[#allocation8 + $0x180] sm:$0xff]
        %v1455 = vld [vmem:[#allocation8 + $0x188] sm:$0xff]
        %v1456 = vld [vmem:[#allocation8 + $0x190] sm:$0xff]
        %v1457 = vld [vmem:[#allocation8 + $0x198] sm:$0xff]
        %v1458 = vld [vmem:[#allocation8 + $0x1a0] sm:$0xff]
        %v1459 = vld [vmem:[#allocation8 + $0x1a8] sm:$0xff]
        %v1460 = vld [vmem:[#allocation8 + $0x1b0] sm:$0xff]
        %v1461 = vld [vmem:[#allocation8 + $0x1b8] sm:$0xff]
        %v1462 = vld [vmem:[#allocation8 + $0x1c0] sm:$0xff]
        %v1463 = vld [vmem:[#allocation8 + $0x1c8] sm:$0xff]
        %v1464 = vld [vmem:[#allocation8 + $0x1d0] sm:$0xff]
        %v1465 = vld [vmem:[#allocation8 + $0x1d8] sm:$0xff]
        %v1466 = vld [vmem:[#allocation8 + $0x1e0] sm:$0xff]
        %v1467 = vld [vmem:[#allocation8 + $0x1e8] sm:$0xff]
        %v1468 = vld [vmem:[#allocation8 + $0x1f0] sm:$0xff]
        %v1469 = vld [vmem:[#allocation8 + $0x1f8] sm:$0xff]
        %v1470 = vld [vmem:[%s14] sm:$0x3]
        %v1472 = vlaneseq
        %v1473 = vshrl.u32 %v1472, 7
        %v1474 = vsub.s32 0, %v1473
        %v1475 = vrot.slane %v1470, %v1474
        %v1476 = vlaneseq
        %v1477 = vshrl.u32 %v1476, 7
        %v1478 = vsub.s32 1, %v1477
        %v1479 = vrot.slane %v1470, %v1478
        %1482 = vmatprep.subr.mxu0 %v1407
        %1483 = vmatpush1.msra.mxu0 %v1406
        %1484 = vmatprep.subr.mxu0 %v1409
        %1485 = vmatpush1.msra.mxu0 %v1408
        %1486 = vmatprep.subr.mxu0 %v1411
        %1487 = vmatpush1.msra.mxu0 %v1410
        %1488 = vmatprep.subr.mxu0 %v1413
        %1489 = vmatpush1.msra.mxu0 %v1412
        %1490 = vmatprep.subr.mxu0 %v1415
        %1491 = vmatpush1.msra.mxu0 %v1414
        %1492 = vmatprep.subr.mxu0 %v1417
        %1493 = vmatpush1.msra.mxu0 %v1416
        %1494 = vmatprep.subr.mxu0 %v1419
        %1495 = vmatpush1.msra.mxu0 %v1418
        %1496 = vmatprep.subr.mxu0 %v1421
        %1497 = vmatpush1.msra.mxu0 %v1420
        %1498 = vmatprep.subr.mxu0 %v1423
        %1499 = vmatpush1.msra.mxu0 %v1422
        %1500 = vmatprep.subr.mxu0 %v1425
        %1501 = vmatpush1.msra.mxu0 %v1424
        %1502 = vmatprep.subr.mxu0 %v1427
        %1503 = vmatpush1.msra.mxu0 %v1426
        %1504 = vmatprep.subr.mxu0 %v1429
        %1505 = vmatpush1.msra.mxu0 %v1428
        %1506 = vmatprep.subr.mxu0 %v1431
        %1507 = vmatpush1.msra.mxu0 %v1430
        %1508 = vmatprep.subr.mxu0 %v1433
        %1509 = vmatpush1.msra.mxu0 %v1432
        %1510 = vmatprep.subr.mxu0 %v1435
        %1511 = vmatpush1.msra.mxu0 %v1434
        %1512 = vmatprep.subr.mxu0 %v1437
        %1513 = vmatpush1.msra.mxu0 %v1436
        %1514 = vmatprep.subr.mxu0 %v1439
        %1515 = vmatpush1.msra.mxu0 %v1438
        %1516 = vmatprep.subr.mxu0 %v1441
        %1517 = vmatpush1.msra.mxu0 %v1440
        %1518 = vmatprep.subr.mxu0 %v1443
        %1519 = vmatpush1.msra.mxu0 %v1442
        %1520 = vmatprep.subr.mxu0 %v1445
        %1521 = vmatpush1.msra.mxu0 %v1444
        %1522 = vmatprep.subr.mxu0 %v1447
        %1523 = vmatpush1.msra.mxu0 %v1446
        %1524 = vmatprep.subr.mxu0 %v1449
        %1525 = vmatpush1.msra.mxu0 %v1448
        %1526 = vmatprep.subr.mxu0 %v1451
        %1527 = vmatpush1.msra.mxu0 %v1450
        %1528 = vmatprep.subr.mxu0 %v1453
        %1529 = vmatpush1.msra.mxu0 %v1452
        %1530 = vmatprep.subr.mxu0 %v1455
        %1531 = vmatpush1.msra.mxu0 %v1454
        %1532 = vmatprep.subr.mxu0 %v1457
        %1533 = vmatpush1.msra.mxu0 %v1456
        %1534 = vmatprep.subr.mxu0 %v1459
        %1535 = vmatpush1.msra.mxu0 %v1458
        %1536 = vmatprep.subr.mxu0 %v1461
        %1537 = vmatpush1.msra.mxu0 %v1460
        %1538 = vmatprep.subr.mxu0 %v1463
        %1539 = vmatpush1.msra.mxu0 %v1462
        %1540 = vmatprep.subr.mxu0 %v1465
        %1541 = vmatpush1.msra.mxu0 %v1464
        %1542 = vmatprep.subr.mxu0 %v1467
        %1543 = vmatpush1.msra.mxu0 %v1466
        %1544 = vmatprep.subr.mxu0 %v1469
        %1545 = vmatpush1.msra.mxu0 %v1468
        %1546 = vmatprep.mubr.f32.mxu0 %v1399
        %1547 = vmatmul.mubr.f32.gmra.mrb[0].mxu0 %v1398
        %v1548 = vpop.f32.mrb[0].mxu0
        %v1549 = vadd.f32 %v1475, %v1548
        %v1550 = vpop.f32.mrb[0].mxu0
        %v1551 = vadd.f32 %v1479, %v1550
        %1552 = vmatprep.mubr.f32.mxu0 %v1401
        %1553 = vmatmul.mubr.f32.gmra.mrb[0].mxu0 %v1400
        %v1554 = vpop.f32.mrb[0].mxu0
        %v1555 = vadd.f32 %v1475, %v1554
        %v1556 = vpop.f32.mrb[0].mxu0
        %v1557 = vadd.f32 %v1479, %v1556
        %1558 = vmatprep.mubr.f32.mxu0 %v1403
        %1559 = vmatmul.mubr.f32.gmra.mrb[0].mxu0 %v1402
        %v1560 = vpop.f32.mrb[0].mxu0
        %v1561 = vadd.f32 %v1475, %v1560
        %v1562 = vpop.f32.mrb[0].mxu0
        %v1563 = vadd.f32 %v1479, %v1562
        %1564 = vmatprep.mubr.f32.mxu0 %v1405
        %1565 = vmatmul.mubr.f32.gmra.mrb[0].mxu0 %v1404
        %v1566 = vpop.f32.mrb[0].mxu0
        %v1567 = vadd.f32 %v1475, %v1566
        %v1568 = vpop.f32.mrb[0].mxu0
        %v1569 = vadd.f32 %v1479, %v1568
        %1570 = vdwg.mxu0
        %v1571 = vmax.f32 %v1549, 0.0
        %v1572 = vmax.f32 %v1551, 0.0
        %v1573 = vmax.f32 %v1555, 0.0
        %v1574 = vmax.f32 %v1557, 0.0
        %v1575 = vmax.f32 %v1561, 0.0
        %v1576 = vmax.f32 %v1563, 0.0
        %v1577 = vmax.f32 %v1567, 0.0
        %v1578 = vmax.f32 %v1569, 0.0
        %v1579 = vld [vmem:[%s15] sm:$0x3]
        %v1581 = vlaneseq
        %v1582 = vshrl.u32 %v1581, 7
        %v1583 = vsub.s32 0, %v1582
        %v1584 = vrot.slane %v1579, %v1583
        %v1585 = vlaneseq
        %v1586 = vshrl.u32 %v1585, 7
        %v1587 = vsub.s32 1, %v1586
        %v1588 = vrot.slane %v1579, %v1587
        %v1591 = vmul.f32 %v1571, %v1584
        %v1592 = vmul.f32 %v1572, %v1588
        %v1593 = vmul.f32 %v1573, %v1584
        %v1594 = vmul.f32 %v1574, %v1588
        %v1595 = vmul.f32 %v1575, %v1584
        %v1596 = vmul.f32 %v1576, %v1588
        %v1597 = vmul.f32 %v1577, %v1584
        %v1598 = vmul.f32 %v1578, %v1588
        %v1599 = vadd.f32 %v1591, %v1592
        %1600 = vadd.xlane.f32.xlu0 %v1599
        %v1601 = vpop.xlane.xlu0 %1600
        %v1602 = vadd.f32 %v1593, %v1594
        %1603 = vadd.xlane.f32.xlu0 %v1602
        %v1604 = vpop.xlane.xlu0 %1603
        %v1605 = vadd.f32 %v1595, %v1596
        %1606 = vadd.xlane.f32.xlu0 %v1605
        %v1607 = vpop.xlane.xlu0 %1606
        %v1608 = vadd.f32 %v1597, %v1598
        %1609 = vadd.xlane.f32.xlu0 %v1608
        %v1610 = vpop.xlane.xlu0 %1609
        %v1611 = vld [vmem:[#allocation2] sm:$0x1]
        %v1613 = vlaneseq
        %v1614 = vshrl.u32 %v1613, 7
        %v1615 = vsub.s32 0, %v1614
        %v1616 = vrot.slane %v1611, %v1615
        %v1618 = vadd.f32 %v1601, %v1616
        %v1619 = vadd.f32 %v1604, %v1616
        %v1620 = vadd.f32 %v1607, %v1616
        %v1621 = vadd.f32 %v1610, %v1616
        %vm1622 = vcmask 7168
        %1623 = vst.msk [vmem:[%s611] sm:$0xff] %vm1622, %v1618
        %1624 = vst.msk [vmem:[%s611 + $0x8] sm:$0xff] %vm1622, %v1619
        %1625 = vst.msk [vmem:[%s611 + $0x10] sm:$0xff] %vm1622, %v1620
        %1626 = vst.msk [vmem:[%s611 + $0x18] sm:$0xff] %vm1622, %v1621
        %s1627 = smul.u32 4, %s33
        %p1628 = scmp.lt.s32.totalorder %s1627, 7
        %s1629 = scalar_select %p1628, %s1627, 7
        %s1630 = smul.addr %s1629, 8
        %s1631 = scalar_lea.vmem %s17, %s1630
        // Predicated region
        $region105: #{forward.1} parent=87 // pred_check
          %p1632 = pneg %p413
        $region106: #{forward.1} parent=87 // pred_check_branch
          %1634 = sbr.rel (%p1632) target = $region108
        $region107: #{forward.1} parent=87 // pred_region
          %s1635 = smul.u32 4, %s33
        $region108: #{forward.1} parent=87 // pred_fallthru
          _
      $region88: #{forward.1} parent=5 // pred_fallthru
        _
      %p1636 = scmp.le.s32.totalorder 2, %s28
      // Predicated region
      $region109: #{forward.1} parent=5 // pred_check
        %p1637 = pneg %p1636
      $region110: #{forward.1} parent=5 // pred_check_branch
        %1639 = sbr.rel (%p1637) target = $region112
      $region111: #{forward.1} parent=5 // pred_region
        %s1640 = ssub.s32 %s28, 2
        // Predicated region
        $region113: #{forward.1} parent=111 // pred_check
          %p1641 = pneg %p419
        $region114: #{forward.1} parent=111 // pred_check_branch
          %1643 = sbr.rel (%p1641) target = $region116
        $region115: #{forward.1} parent=111 // pred_region
          %s1644 = smul.u32 4, %s34
          %p1645 = scmp.lt.s32.totalorder %s1644, 7
          %s1646 = scalar_select %p1645, %s1644, 7
          %s1647 = smul.addr %s1646, 8
          %s1648 = scalar_lea.vmem %s17, %s1647
        $region116: #{forward.1} parent=111 // pred_fallthru
          _
      $region112: #{forward.1} parent=5 // pred_fallthru
        _
    $region6: #{forward.1} parent=1 // loop_footer
      %s32 = sadd.s32 1, %s28
    $region7: #{forward.1} parent=1 // loop_footer_branch
      %27 = sbr.rel target = $region3
    $region8: #{forward.1} parent=1 // loop_exit
      _
    %1649 = vsyncpa [#allocation4], 1
    %s1650 = scalar_lea.sflag [#allocation4], 1
    %1651 = vsyncpa %s1650, 1
    %1652 = vsyncpa [#allocation6], 1
    %1653 = vsyncpa [#allocation9], 1

</llo_original>
